<compile_context>
chip_gen: v7x
topology: tpu7x:2x2x1
jax: 0.10.0
libtpu: 0.0.40
codegen_flags: <defaults>
</compile_context>

<pallas_src>
import jax
import jax.numpy as jnp
from jax.experimental import pallas as pl
from jax.experimental.pallas import tpu as pltpu

EPS = 1e-3


def conv_bn_kernel(x_ref, w_ref, gamma_ref, beta_ref, o_ref):
    # x_ref: (Cin, P) f32, w_ref: (Cout_blk, Cin) bf16,
    # gamma/beta: (Cout_blk, 1) f32, o_ref: (Cout_blk, P) f32.
    x = x_ref[...].astype(jnp.bfloat16)
    w = w_ref[...]

    # 1x1 conv == matmul: (Cout_blk, Cin) @ (Cin, P), native bf16 MXU, f32 acc.
    y = jnp.dot(w, x, preferred_element_type=jnp.float32)          # (Cout_blk, P)

    # BatchNorm2d training-mode stats over all P = N*H*W pixels (biased variance),
    # computed in one pass and folded into a single scale/shift FMA.
    inv_p = 1.0 / y.shape[1]
    mean = jnp.sum(y, axis=1, keepdims=True) * inv_p               # (Cout_blk, 1)
    ex2 = jnp.sum(y * y, axis=1, keepdims=True) * inv_p            # (Cout_blk, 1)
    var = ex2 - mean * mean
    inv_std = jax.lax.rsqrt(var + EPS)

    scale = inv_std * gamma_ref[...]
    shift = beta_ref[...] - mean * scale
    o_ref[...] = (y * scale + shift).astype(o_ref.dtype)


def _cout_block(cout):
    # v7x has 2 TensorCores/chip: shard Cout across them via a parallel grid axis.
    # v5e/v6e have 1 TC: keep a single block to avoid per-grid-step overhead.
    try:
        kind = jax.devices()[0].device_kind.lower()
    except Exception:
        kind = ""
    if ("v7" in kind or "7x" in kind) and cout % 256 == 0:
        return cout // 2
    return cout


def conv2d_1x1_batchnorm(x_nchw, weight_oi, gamma, beta):
    """x_nchw: (N, Cin, H, W) f32; weight_oi: (Cout, Cin); gamma/beta: (Cout,)."""
    n, cin, h, w = x_nchw.shape
    cout = weight_oi.shape[0]
    p = n * h * w

    # NCHW -> (Cin, P). For N == 1 this is a pure reshape (no transpose kernel).
    if n == 1:
        x_mat = x_nchw.reshape(cin, p)
    else:
        x_mat = jnp.transpose(x_nchw, (1, 0, 2, 3)).reshape(cin, p)

    w_bf16 = weight_oi.astype(jnp.bfloat16)            # (Cout, Cin), no transpose
    gamma2 = gamma.astype(jnp.float32).reshape(cout, 1)
    beta2 = beta.astype(jnp.float32).reshape(cout, 1)

    blk = _cout_block(cout)
    nblk = cout // blk

    cost = pl.CostEstimate(
        flops=2 * p * cin * cout,
        transcendentals=cout,  # one rsqrt per output channel
        bytes_accessed=(x_mat.size * 4 + w_bf16.size * 2
                        + 2 * cout * 4 + cout * p * 4),
    )

    out_mat = pl.pallas_call(
        conv_bn_kernel,
        out_shape=jax.ShapeDtypeStruct((cout, p), x_nchw.dtype),
        grid=(nblk,),
        in_specs=[
            pl.BlockSpec((cin, p), lambda i: (0, 0)),    # x resident across steps
            pl.BlockSpec((blk, cin), lambda i: (i, 0)),
            pl.BlockSpec((blk, 1), lambda i: (i, 0)),
            pl.BlockSpec((blk, 1), lambda i: (i, 0)),
        ],
        out_specs=pl.BlockSpec((blk, p), lambda i: (i, 0)),
        compiler_params=pltpu.CompilerParams(dimension_semantics=("parallel",)),
        cost_estimate=cost,
    )(x_mat, w_bf16, gamma2, beta2)

    # (Cout, P) -> NCHW. Pure reshape for N == 1.
    if n == 1:
        return out_mat.reshape(1, cout, h, w)
    return jnp.transpose(out_mat.reshape(cout, n, h, w), (1, 0, 2, 3))


def reference(x_nchw, weight_oi, gamma, beta):
    # pure-JAX f32 reference (conv1x1 + training-mode batchnorm, biased variance)
    y = jnp.einsum("nchw,oc->nohw", x_nchw, weight_oi)
    mean = jnp.mean(y, axis=(0, 2, 3), keepdims=True)
    var = jnp.mean((y - mean) ** 2, axis=(0, 2, 3), keepdims=True)
    return (y - mean) / jnp.sqrt(var + EPS) * gamma[None, :, None, None] + beta[
        None, :, None, None
    ]


if __name__ == "__main__":
    key = jax.random.PRNGKey(0)
    k_x, k_w = jax.random.split(key)

    N, CIN, H, W = 1, 1536, 7, 7
    COUT = 256

    x = jax.random.normal(k_x, (N, CIN, H, W), dtype=jnp.float32)

    # Conv2d(1536, 256, 1x1, bias=False): weight (256, 1536, 1, 1) -> (256, 1536)
    fan_in = CIN * 1 * 1
    bound = 1.0 / (fan_in ** 0.5)
    conv_w = jax.random.uniform(
        k_w, (COUT, CIN), dtype=jnp.float32, minval=-bound, maxval=bound
    )
    # BatchNorm2d affine params (PyTorch default init)
    gamma = jnp.ones((COUT,), dtype=jnp.float32)
    beta = jnp.zeros((COUT,), dtype=jnp.float32)

    out = conv2d_1x1_batchnorm(x, conv_w, gamma, beta)
    out = jax.block_until_ready(out)

    ref = reference(x, conv_w, gamma, beta)
    assert out.shape == (N, COUT, H, W)
    # bf16 matmul operands (f32 accumulation): tolerance widened vs pure-f32 ref.
    assert jnp.allclose(out, ref, atol=2e-2, rtol=2e-2)

    print("KERNEL_OK")
</pallas_src>

<mosaic_0001>
module attributes {stable_mosaic.version = 11 : i64} {
  func.func @conv_bn_kernel(%arg0: i32, %arg1: memref<1536x49xf32, #tpu.memory_space<vmem>>, %arg2: memref<256x1536xbf16, #tpu.memory_space<vmem>>, %arg3: memref<256x1xf32, #tpu.memory_space<vmem>>, %arg4: memref<256x1xf32, #tpu.memory_space<vmem>>, %arg5: memref<256x49xf32, #tpu.memory_space<vmem>>) attributes {dimension_semantics = [#tpu.dimension_semantics<parallel>], iteration_bounds = array<i64: 1>, scalar_prefetch = 0 : i64, scratch_operands = 0 : i64, tpu.core_type = #tpu.core_type<tc>, window_params = [{pipeline_mode = #tpu.pipeline_mode<synchronous>, transform_indices = @transform_0, window_bounds = array<i64: 1536, 49>}, {transform_indices = @transform_1, window_bounds = array<i64: 256, 1536>}, {transform_indices = @transform_2, window_bounds = array<i64: 256, 1>}, {transform_indices = @transform_3, window_bounds = array<i64: 256, 1>}, {transform_indices = @transform_4, window_bounds = array<i64: 256, 49>}]} {
    %c0 = arith.constant 0 : index
    %c0_0 = arith.constant 0 : index
    %0 = vector.load %arg1[%c0, %c0_0] : memref<1536x49xf32, #tpu.memory_space<vmem>>, vector<1536x49xf32>
    %1 = arith.truncf %0 : vector<1536x49xf32> to vector<1536x49xbf16>
    %c0_1 = arith.constant 0 : index
    %c0_2 = arith.constant 0 : index
    %2 = vector.load %arg2[%c0_1, %c0_2] : memref<256x1536xbf16, #tpu.memory_space<vmem>>, vector<256x1536xbf16>
    %cst = arith.constant dense<0.000000e+00> : vector<256x49xf32>
    %3 = tpu.matmul %2, %1, %cst {dimension_numbers = #tpu.dot_dimension_numbers<[1], [0], [0], [1], [0, 0, 1, 1], [], []>} : vector<256x1536xbf16>, vector<1536x49xbf16>, vector<256x49xf32> -> vector<256x49xf32>
    %cst_3 = arith.constant dense<0.000000e+00> : vector<256xf32>
    %4 = vector.multi_reduction <add>, %3, %cst_3 [1] : vector<256x49xf32> to vector<256xf32>
    %5 = vector.shape_cast %4 : vector<256xf32> to vector<256x1xf32>
    %cst_4 = arith.constant 0.0204081628 : f32
    %6 = vector.broadcast %cst_4 : f32 to vector<256x1xf32>
    %7 = arith.mulf %5, %6 : vector<256x1xf32>
    %8 = arith.mulf %3, %3 : vector<256x49xf32>
    %cst_5 = arith.constant dense<0.000000e+00> : vector<256xf32>
    %9 = vector.multi_reduction <add>, %8, %cst_5 [1] : vector<256x49xf32> to vector<256xf32>
    %10 = vector.shape_cast %9 : vector<256xf32> to vector<256x1xf32>
    %cst_6 = arith.constant 0.0204081628 : f32
    %11 = vector.broadcast %cst_6 : f32 to vector<256x1xf32>
    %12 = arith.mulf %10, %11 : vector<256x1xf32>
    %13 = arith.mulf %7, %7 : vector<256x1xf32>
    %14 = arith.subf %12, %13 : vector<256x1xf32>
    %cst_7 = arith.constant 1.000000e-03 : f32
    %15 = vector.broadcast %cst_7 : f32 to vector<256x1xf32>
    %16 = arith.addf %14, %15 : vector<256x1xf32>
    %17 = math.rsqrt %16 : vector<256x1xf32>
    %c0_8 = arith.constant 0 : index
    %c0_9 = arith.constant 0 : index
    %18 = vector.load %arg3[%c0_8, %c0_9] : memref<256x1xf32, #tpu.memory_space<vmem>>, vector<256x1xf32>
    %19 = arith.mulf %17, %18 : vector<256x1xf32>
    %c0_10 = arith.constant 0 : index
    %c0_11 = arith.constant 0 : index
    %20 = vector.load %arg4[%c0_10, %c0_11] : memref<256x1xf32, #tpu.memory_space<vmem>>, vector<256x1xf32>
    %21 = arith.mulf %7, %19 : vector<256x1xf32>
    %22 = arith.subf %20, %21 : vector<256x1xf32>
    %23 = vector.broadcast %19 : vector<256x1xf32> to vector<256x49xf32>
    %24 = arith.mulf %3, %23 : vector<256x49xf32>
    %25 = vector.broadcast %22 : vector<256x1xf32> to vector<256x49xf32>
    %26 = arith.addf %24, %25 : vector<256x49xf32>
    %c0_12 = arith.constant 0 : index
    %c0_13 = arith.constant 0 : index
    %27 = vector.load %arg5[%c0_12, %c0_13] : memref<256x49xf32, #tpu.memory_space<vmem>>, vector<256x49xf32>
    tpu.vector_store %arg5[%c0_12, %c0_13], %26 {strides = array<i32>} : memref<256x49xf32, #tpu.memory_space<vmem>>, vector<256x49xf32>,
    return
  }
  func.func @transform_0(%arg0: i32) -> (i32, i32) {
    %c0_i32 = arith.constant 0 : i32
    %c0_i32_0 = arith.constant 0 : i32
    %c0_i32_1 = arith.constant 0 : i32
    return %c0_i32, %c0_i32_0 : i32, i32
  }
  func.func @transform_1(%arg0: i32) -> (i32, i32) {
    %c0_i32 = arith.constant 0 : i32
    %c0_i32_0 = arith.constant 0 : i32
    return %arg0, %c0_i32 : i32, i32
  }
  func.func @transform_2(%arg0: i32) -> (i32, i32) {
    %c0_i32 = arith.constant 0 : i32
    %c0_i32_0 = arith.constant 0 : i32
    return %arg0, %c0_i32 : i32, i32
  }
  func.func @transform_3(%arg0: i32) -> (i32, i32) {
    %c0_i32 = arith.constant 0 : i32
    %c0_i32_0 = arith.constant 0 : i32
    return %arg0, %c0_i32 : i32, i32
  }
  func.func @transform_4(%arg0: i32) -> (i32, i32) {
    %c0_i32 = arith.constant 0 : i32
    %c0_i32_0 = arith.constant 0 : i32
    return %arg0, %c0_i32 : i32, i32
  }
}

</mosaic_0001>

<llo_original>
// kernel: tpu_custom_call.1
$region0: #{tpu_custom_call.1}
  #allocation0 [shape = 'u32[]', space=smem, size = 0x4, offset = 0x4, fixed_abs, tag = 'smem constant byte address 0x4 - core index']
  #allocation1 [shape = 'u32[144,128]{1,0:T(1,128)}', space=vmem, size = 0x12000, scoped, tag = 'internal scratch']
  %s0 = inlined_call_operand.vmem [shape: f32[1536,49], index: 0, kind: input, shape index: {}]
  %s1 = inlined_call_operand.vmem [shape: bf16[256,1536], index: 1, kind: input, shape index: {}]
  %s2 = inlined_call_operand.vmem [shape: f32[256,1], index: 2, kind: input, shape index: {}]
  %s3 = inlined_call_operand.vmem [shape: f32[256,1], index: 3, kind: input, shape index: {}]
  %s4 = inlined_call_operand.vmem [shape: f32[256,49], index: 4, kind: output, shape index: {}]
  %s5 = sld [smem:[#allocation0]]
  $region26: #{tpu_custom_call.1} parent=0
    _
  %s7 = ssub.s32 1, %s5
  %s8 = scalar_select 0, %s7, %s5
  // Predicated region
  $region2: #{tpu_custom_call.1} parent=0 // pred_check
    _
  $region3: #{tpu_custom_call.1} parent=0 // pred_check_branch
    %10 = sbr.rel (0) target = $region5
  $region4: #{tpu_custom_call.1} parent=0 // pred_region
    _
  $region5: #{tpu_custom_call.1} parent=0 // pred_fallthru
    _
  // Predicated region
  $region6: #{tpu_custom_call.1} parent=0 // pred_check
    _
  $region7: #{tpu_custom_call.1} parent=0 // pred_check_branch
    %12 = sbr.rel (0) target = $region9
  $region8: #{tpu_custom_call.1} parent=0 // pred_region
    _
  $region9: #{tpu_custom_call.1} parent=0 // pred_fallthru
    _
  // Predicated region
  $region10: #{tpu_custom_call.1} parent=0 // pred_check
    _
  $region11: #{tpu_custom_call.1} parent=0 // pred_check_branch
    %14 = sbr.rel (0) target = $region13
  $region12: #{tpu_custom_call.1} parent=0 // pred_region
    _
  $region13: #{tpu_custom_call.1} parent=0 // pred_fallthru
    _
  // Predicated region
  $region14: #{tpu_custom_call.1} parent=0 // pred_check
    _
  $region15: #{tpu_custom_call.1} parent=0 // pred_check_branch
    %16 = sbr.rel (0) target = $region17
  $region16: #{tpu_custom_call.1} parent=0 // pred_region
    _
  $region17: #{tpu_custom_call.1} parent=0 // pred_fallthru
    _
  %v18 = vld [vmem:[%s0] sm:$0xff]
  %v19 = vld [vmem:[%s0 + $0x8] sm:$0xff]
  %v20 = vld [vmem:[%s0 + $0x10] sm:$0xff]
  %v21 = vld [vmem:[%s0 + $0x18] sm:$0xff]
  %v22 = vld [vmem:[%s0 + $0x20] sm:$0xff]
  %v23 = vld [vmem:[%s0 + $0x28] sm:$0xff]
  %v24 = vld [vmem:[%s0 + $0x30] sm:$0xff]
  %v25 = vld [vmem:[%s0 + $0x38] sm:$0xff]
  %v26 = vld [vmem:[%s0 + $0x40] sm:$0xff]
  %v27 = vld [vmem:[%s0 + $0x48] sm:$0xff]
  %v28 = vld [vmem:[%s0 + $0x50] sm:$0xff]
  %v29 = vld [vmem:[%s0 + $0x58] sm:$0xff]
  %v30 = vld [vmem:[%s0 + $0x60] sm:$0xff]
  %v31 = vld [vmem:[%s0 + $0x68] sm:$0xff]
  %v32 = vld [vmem:[%s0 + $0x70] sm:$0xff]
  %v33 = vld [vmem:[%s0 + $0x78] sm:$0xff]
  %v34 = vld [vmem:[%s0 + $0x80] sm:$0xff]
  %v35 = vld [vmem:[%s0 + $0x88] sm:$0xff]
  %v36 = vld [vmem:[%s0 + $0x90] sm:$0xff]
  %v37 = vld [vmem:[%s0 + $0x98] sm:$0xff]
  %v38 = vld [vmem:[%s0 + $0xa0] sm:$0xff]
  %v39 = vld [vmem:[%s0 + $0xa8] sm:$0xff]
  %v40 = vld [vmem:[%s0 + $0xb0] sm:$0xff]
  %v41 = vld [vmem:[%s0 + $0xb8] sm:$0xff]
  %v42 = vld [vmem:[%s0 + $0xc0] sm:$0xff]
  %v43 = vld [vmem:[%s0 + $0xc8] sm:$0xff]
  %v44 = vld [vmem:[%s0 + $0xd0] sm:$0xff]
  %v45 = vld [vmem:[%s0 + $0xd8] sm:$0xff]
  %v46 = vld [vmem:[%s0 + $0xe0] sm:$0xff]
  %v47 = vld [vmem:[%s0 + $0xe8] sm:$0xff]
  %v48 = vld [vmem:[%s0 + $0xf0] sm:$0xff]
  %v49 = vld [vmem:[%s0 + $0xf8] sm:$0xff]
  %v50 = vld [vmem:[%s0 + $0x100] sm:$0xff]
  %v51 = vld [vmem:[%s0 + $0x108] sm:$0xff]
  %v52 = vld [vmem:[%s0 + $0x110] sm:$0xff]
  %v53 = vld [vmem:[%s0 + $0x118] sm:$0xff]
  %v54 = vld [vmem:[%s0 + $0x120] sm:$0xff]
  %v55 = vld [vmem:[%s0 + $0x128] sm:$0xff]
  %v56 = vld [vmem:[%s0 + $0x130] sm:$0xff]
  %v57 = vld [vmem:[%s0 + $0x138] sm:$0xff]
  %v58 = vld [vmem:[%s0 + $0x140] sm:$0xff]
  %v59 = vld [vmem:[%s0 + $0x148] sm:$0xff]
  %v60 = vld [vmem:[%s0 + $0x150] sm:$0xff]
  %v61 = vld [vmem:[%s0 + $0x158] sm:$0xff]
  %v62 = vld [vmem:[%s0 + $0x160] sm:$0xff]
  %v63 = vld [vmem:[%s0 + $0x168] sm:$0xff]
  %v64 = vld [vmem:[%s0 + $0x170] sm:$0xff]
  %v65 = vld [vmem:[%s0 + $0x178] sm:$0xff]
  %v66 = vld [vmem:[%s0 + $0x180] sm:$0xff]
  %v67 = vld [vmem:[%s0 + $0x188] sm:$0xff]
  %v68 = vld [vmem:[%s0 + $0x190] sm:$0xff]
  %v69 = vld [vmem:[%s0 + $0x198] sm:$0xff]
  %v70 = vld [vmem:[%s0 + $0x1a0] sm:$0xff]
  %v71 = vld [vmem:[%s0 + $0x1a8] sm:$0xff]
  %v72 = vld [vmem:[%s0 + $0x1b0] sm:$0xff]
  %v73 = vld [vmem:[%s0 + $0x1b8] sm:$0xff]
  %v74 = vld [vmem:[%s0 + $0x1c0] sm:$0xff]
  %v75 = vld [vmem:[%s0 + $0x1c8] sm:$0xff]
  %v76 = vld [vmem:[%s0 + $0x1d0] sm:$0xff]
  %v77 = vld [vmem:[%s0 + $0x1d8] sm:$0xff]
  %v78 = vld [vmem:[%s0 + $0x1e0] sm:$0xff]
  %v79 = vld [vmem:[%s0 + $0x1e8] sm:$0xff]
  %v80 = vld [vmem:[%s0 + $0x1f0] sm:$0xff]
  %v81 = vld [vmem:[%s0 + $0x1f8] sm:$0xff]
  %v82 = vld [vmem:[%s0 + $0x200] sm:$0xff]
  %v83 = vld [vmem:[%s0 + $0x208] sm:$0xff]
  %v84 = vld [vmem:[%s0 + $0x210] sm:$0xff]
  %v85 = vld [vmem:[%s0 + $0x218] sm:$0xff]
  %v86 = vld [vmem:[%s0 + $0x220] sm:$0xff]
  %v87 = vld [vmem:[%s0 + $0x228] sm:$0xff]
  %v88 = vld [vmem:[%s0 + $0x230] sm:$0xff]
  %v89 = vld [vmem:[%s0 + $0x238] sm:$0xff]
  %v90 = vld [vmem:[%s0 + $0x240] sm:$0xff]
  %v91 = vld [vmem:[%s0 + $0x248] sm:$0xff]
  %v92 = vld [vmem:[%s0 + $0x250] sm:$0xff]
  %v93 = vld [vmem:[%s0 + $0x258] sm:$0xff]
  %v94 = vld [vmem:[%s0 + $0x260] sm:$0xff]
  %v95 = vld [vmem:[%s0 + $0x268] sm:$0xff]
  %v96 = vld [vmem:[%s0 + $0x270] sm:$0xff]
  %v97 = vld [vmem:[%s0 + $0x278] sm:$0xff]
  %v98 = vld [vmem:[%s0 + $0x280] sm:$0xff]
  %v99 = vld [vmem:[%s0 + $0x288] sm:$0xff]
  %v100 = vld [vmem:[%s0 + $0x290] sm:$0xff]
  %v101 = vld [vmem:[%s0 + $0x298] sm:$0xff]
  %v102 = vld [vmem:[%s0 + $0x2a0] sm:$0xff]
  %v103 = vld [vmem:[%s0 + $0x2a8] sm:$0xff]
  %v104 = vld [vmem:[%s0 + $0x2b0] sm:$0xff]
  %v105 = vld [vmem:[%s0 + $0x2b8] sm:$0xff]
  %v106 = vld [vmem:[%s0 + $0x2c0] sm:$0xff]
  %v107 = vld [vmem:[%s0 + $0x2c8] sm:$0xff]
  %v108 = vld [vmem:[%s0 + $0x2d0] sm:$0xff]
  %v109 = vld [vmem:[%s0 + $0x2d8] sm:$0xff]
  %v110 = vld [vmem:[%s0 + $0x2e0] sm:$0xff]
  %v111 = vld [vmem:[%s0 + $0x2e8] sm:$0xff]
  %v112 = vld [vmem:[%s0 + $0x2f0] sm:$0xff]
  %v113 = vld [vmem:[%s0 + $0x2f8] sm:$0xff]
  %v114 = vld [vmem:[%s0 + $0x300] sm:$0xff]
  %v115 = vld [vmem:[%s0 + $0x308] sm:$0xff]
  %v116 = vld [vmem:[%s0 + $0x310] sm:$0xff]
  %v117 = vld [vmem:[%s0 + $0x318] sm:$0xff]
  %v118 = vld [vmem:[%s0 + $0x320] sm:$0xff]
  %v119 = vld [vmem:[%s0 + $0x328] sm:$0xff]
  %v120 = vld [vmem:[%s0 + $0x330] sm:$0xff]
  %v121 = vld [vmem:[%s0 + $0x338] sm:$0xff]
  %v122 = vld [vmem:[%s0 + $0x340] sm:$0xff]
  %v123 = vld [vmem:[%s0 + $0x348] sm:$0xff]
  %v124 = vld [vmem:[%s0 + $0x350] sm:$0xff]
  %v125 = vld [vmem:[%s0 + $0x358] sm:$0xff]
  %v126 = vld [vmem:[%s0 + $0x360] sm:$0xff]
  %v127 = vld [vmem:[%s0 + $0x368] sm:$0xff]
  %v128 = vld [vmem:[%s0 + $0x370] sm:$0xff]
  %v129 = vld [vmem:[%s0 + $0x378] sm:$0xff]
  %v130 = vld [vmem:[%s0 + $0x380] sm:$0xff]
  %v131 = vld [vmem:[%s0 + $0x388] sm:$0xff]
  %v132 = vld [vmem:[%s0 + $0x390] sm:$0xff]
  %v133 = vld [vmem:[%s0 + $0x398] sm:$0xff]
  %v134 = vld [vmem:[%s0 + $0x3a0] sm:$0xff]
  %v135 = vld [vmem:[%s0 + $0x3a8] sm:$0xff]
  %v136 = vld [vmem:[%s0 + $0x3b0] sm:$0xff]
  %v137 = vld [vmem:[%s0 + $0x3b8] sm:$0xff]
  %v138 = vld [vmem:[%s0 + $0x3c0] sm:$0xff]
  %v139 = vld [vmem:[%s0 + $0x3c8] sm:$0xff]
  %v140 = vld [vmem:[%s0 + $0x3d0] sm:$0xff]
  %v141 = vld [vmem:[%s0 + $0x3d8] sm:$0xff]
  %v142 = vld [vmem:[%s0 + $0x3e0] sm:$0xff]
  %v143 = vld [vmem:[%s0 + $0x3e8] sm:$0xff]
  %v144 = vld [vmem:[%s0 + $0x3f0] sm:$0xff]
  %v145 = vld [vmem:[%s0 + $0x3f8] sm:$0xff]
  %v146 = vld [vmem:[%s0 + $0x400] sm:$0xff]
  %v147 = vld [vmem:[%s0 + $0x408] sm:$0xff]
  %v148 = vld [vmem:[%s0 + $0x410] sm:$0xff]
  %v149 = vld [vmem:[%s0 + $0x418] sm:$0xff]
  %v150 = vld [vmem:[%s0 + $0x420] sm:$0xff]
  %v151 = vld [vmem:[%s0 + $0x428] sm:$0xff]
  %v152 = vld [vmem:[%s0 + $0x430] sm:$0xff]
  %v153 = vld [vmem:[%s0 + $0x438] sm:$0xff]
  %v154 = vld [vmem:[%s0 + $0x440] sm:$0xff]
  %v155 = vld [vmem:[%s0 + $0x448] sm:$0xff]
  %v156 = vld [vmem:[%s0 + $0x450] sm:$0xff]
  %v157 = vld [vmem:[%s0 + $0x458] sm:$0xff]
  %v158 = vld [vmem:[%s0 + $0x460] sm:$0xff]
  %v159 = vld [vmem:[%s0 + $0x468] sm:$0xff]
  %v160 = vld [vmem:[%s0 + $0x470] sm:$0xff]
  %v161 = vld [vmem:[%s0 + $0x478] sm:$0xff]
  %v162 = vld [vmem:[%s0 + $0x480] sm:$0xff]
  %v163 = vld [vmem:[%s0 + $0x488] sm:$0xff]
  %v164 = vld [vmem:[%s0 + $0x490] sm:$0xff]
  %v165 = vld [vmem:[%s0 + $0x498] sm:$0xff]
  %v166 = vld [vmem:[%s0 + $0x4a0] sm:$0xff]
  %v167 = vld [vmem:[%s0 + $0x4a8] sm:$0xff]
  %v168 = vld [vmem:[%s0 + $0x4b0] sm:$0xff]
  %v169 = vld [vmem:[%s0 + $0x4b8] sm:$0xff]
  %v170 = vld [vmem:[%s0 + $0x4c0] sm:$0xff]
  %v171 = vld [vmem:[%s0 + $0x4c8] sm:$0xff]
  %v172 = vld [vmem:[%s0 + $0x4d0] sm:$0xff]
  %v173 = vld [vmem:[%s0 + $0x4d8] sm:$0xff]
  %v174 = vld [vmem:[%s0 + $0x4e0] sm:$0xff]
  %v175 = vld [vmem:[%s0 + $0x4e8] sm:$0xff]
  %v176 = vld [vmem:[%s0 + $0x4f0] sm:$0xff]
  %v177 = vld [vmem:[%s0 + $0x4f8] sm:$0xff]
  %v178 = vld [vmem:[%s0 + $0x500] sm:$0xff]
  %v179 = vld [vmem:[%s0 + $0x508] sm:$0xff]
  %v180 = vld [vmem:[%s0 + $0x510] sm:$0xff]
  %v181 = vld [vmem:[%s0 + $0x518] sm:$0xff]
  %v182 = vld [vmem:[%s0 + $0x520] sm:$0xff]
  %v183 = vld [vmem:[%s0 + $0x528] sm:$0xff]
  %v184 = vld [vmem:[%s0 + $0x530] sm:$0xff]
  %v185 = vld [vmem:[%s0 + $0x538] sm:$0xff]
  %v186 = vld [vmem:[%s0 + $0x540] sm:$0xff]
  %v187 = vld [vmem:[%s0 + $0x548] sm:$0xff]
  %v188 = vld [vmem:[%s0 + $0x550] sm:$0xff]
  %v189 = vld [vmem:[%s0 + $0x558] sm:$0xff]
  %v190 = vld [vmem:[%s0 + $0x560] sm:$0xff]
  %v191 = vld [vmem:[%s0 + $0x568] sm:$0xff]
  %v192 = vld [vmem:[%s0 + $0x570] sm:$0xff]
  %v193 = vld [vmem:[%s0 + $0x578] sm:$0xff]
  %v194 = vld [vmem:[%s0 + $0x580] sm:$0xff]
  %v195 = vld [vmem:[%s0 + $0x588] sm:$0xff]
  %v196 = vld [vmem:[%s0 + $0x590] sm:$0xff]
  %v197 = vld [vmem:[%s0 + $0x598] sm:$0xff]
  %v198 = vld [vmem:[%s0 + $0x5a0] sm:$0xff]
  %v199 = vld [vmem:[%s0 + $0x5a8] sm:$0xff]
  %v200 = vld [vmem:[%s0 + $0x5b0] sm:$0xff]
  %v201 = vld [vmem:[%s0 + $0x5b8] sm:$0xff]
  %v202 = vld [vmem:[%s0 + $0x5c0] sm:$0xff]
  %v203 = vld [vmem:[%s0 + $0x5c8] sm:$0xff]
  %v204 = vld [vmem:[%s0 + $0x5d0] sm:$0xff]
  %v205 = vld [vmem:[%s0 + $0x5d8] sm:$0xff]
  %v206 = vld [vmem:[%s0 + $0x5e0] sm:$0xff]
  %v207 = vld [vmem:[%s0 + $0x5e8] sm:$0xff]
  %v208 = vld [vmem:[%s0 + $0x5f0] sm:$0xff]
  %v209 = vld [vmem:[%s0 + $0x5f8] sm:$0xff]
  %v210 = vpack.c.bf16 %v19, %v18
  %v211 = vpack.c.bf16 %v21, %v20
  %v212 = vpack.c.bf16 %v23, %v22
  %v213 = vpack.c.bf16 %v25, %v24
  %v214 = vpack.c.bf16 %v27, %v26
  %v215 = vpack.c.bf16 %v29, %v28
  %v216 = vpack.c.bf16 %v31, %v30
  %v217 = vpack.c.bf16 %v33, %v32
  %v218 = vpack.c.bf16 %v35, %v34
  %v219 = vpack.c.bf16 %v37, %v36
  %v220 = vpack.c.bf16 %v39, %v38
  %v221 = vpack.c.bf16 %v41, %v40
  %v222 = vpack.c.bf16 %v43, %v42
  %v223 = vpack.c.bf16 %v45, %v44
  %v224 = vpack.c.bf16 %v47, %v46
  %v225 = vpack.c.bf16 %v49, %v48
  %v226 = vpack.c.bf16 %v51, %v50
  %v227 = vpack.c.bf16 %v53, %v52
  %v228 = vpack.c.bf16 %v55, %v54
  %v229 = vpack.c.bf16 %v57, %v56
  %v230 = vpack.c.bf16 %v59, %v58
  %v231 = vpack.c.bf16 %v61, %v60
  %v232 = vpack.c.bf16 %v63, %v62
  %v233 = vpack.c.bf16 %v65, %v64
  %v234 = vpack.c.bf16 %v67, %v66
  %v235 = vpack.c.bf16 %v69, %v68
  %v236 = vpack.c.bf16 %v71, %v70
  %v237 = vpack.c.bf16 %v73, %v72
  %v238 = vpack.c.bf16 %v75, %v74
  %v239 = vpack.c.bf16 %v77, %v76
  %v240 = vpack.c.bf16 %v79, %v78
  %v241 = vpack.c.bf16 %v81, %v80
  %v242 = vpack.c.bf16 %v83, %v82
  %v243 = vpack.c.bf16 %v85, %v84
  %v244 = vpack.c.bf16 %v87, %v86
  %v245 = vpack.c.bf16 %v89, %v88
  %v246 = vpack.c.bf16 %v91, %v90
  %v247 = vpack.c.bf16 %v93, %v92
  %v248 = vpack.c.bf16 %v95, %v94
  %v249 = vpack.c.bf16 %v97, %v96
  %v250 = vpack.c.bf16 %v99, %v98
  %v251 = vpack.c.bf16 %v101, %v100
  %v252 = vpack.c.bf16 %v103, %v102
  %v253 = vpack.c.bf16 %v105, %v104
  %v254 = vpack.c.bf16 %v107, %v106
  %v255 = vpack.c.bf16 %v109, %v108
  %v256 = vpack.c.bf16 %v111, %v110
  %v257 = vpack.c.bf16 %v113, %v112
  %v258 = vpack.c.bf16 %v115, %v114
  %v259 = vpack.c.bf16 %v117, %v116
  %v260 = vpack.c.bf16 %v119, %v118
  %v261 = vpack.c.bf16 %v121, %v120
  %v262 = vpack.c.bf16 %v123, %v122
  %v263 = vpack.c.bf16 %v125, %v124
  %v264 = vpack.c.bf16 %v127, %v126
  %v265 = vpack.c.bf16 %v129, %v128
  %v266 = vpack.c.bf16 %v131, %v130
  %v267 = vpack.c.bf16 %v133, %v132
  %v268 = vpack.c.bf16 %v135, %v134
  %v269 = vpack.c.bf16 %v137, %v136
  %v270 = vpack.c.bf16 %v139, %v138
  %v271 = vpack.c.bf16 %v141, %v140
  %v272 = vpack.c.bf16 %v143, %v142
  %v273 = vpack.c.bf16 %v145, %v144
  %v274 = vpack.c.bf16 %v147, %v146
  %v275 = vpack.c.bf16 %v149, %v148
  %v276 = vpack.c.bf16 %v151, %v150
  %v277 = vpack.c.bf16 %v153, %v152
  %v278 = vpack.c.bf16 %v155, %v154
  %v279 = vpack.c.bf16 %v157, %v156
  %v280 = vpack.c.bf16 %v159, %v158
  %v281 = vpack.c.bf16 %v161, %v160
  %v282 = vpack.c.bf16 %v163, %v162
  %v283 = vpack.c.bf16 %v165, %v164
  %v284 = vpack.c.bf16 %v167, %v166
  %v285 = vpack.c.bf16 %v169, %v168
  %v286 = vpack.c.bf16 %v171, %v170
  %v287 = vpack.c.bf16 %v173, %v172
  %v288 = vpack.c.bf16 %v175, %v174
  %v289 = vpack.c.bf16 %v177, %v176
  %v290 = vpack.c.bf16 %v179, %v178
  %v291 = vpack.c.bf16 %v181, %v180
  %v292 = vpack.c.bf16 %v183, %v182
  %v293 = vpack.c.bf16 %v185, %v184
  %v294 = vpack.c.bf16 %v187, %v186
  %v295 = vpack.c.bf16 %v189, %v188
  %v296 = vpack.c.bf16 %v191, %v190
  %v297 = vpack.c.bf16 %v193, %v192
  %v298 = vpack.c.bf16 %v195, %v194
  %v299 = vpack.c.bf16 %v197, %v196
  %v300 = vpack.c.bf16 %v199, %v198
  %v301 = vpack.c.bf16 %v201, %v200
  %v302 = vpack.c.bf16 %v203, %v202
  %v303 = vpack.c.bf16 %v205, %v204
  %v304 = vpack.c.bf16 %v207, %v206
  %v305 = vpack.c.bf16 %v209, %v208
  %v306 = vld [vmem:[%s1] sm:$0xff]
  %v307 = vld [vmem:[%s1 + $0x8] sm:$0xff]
  %v308 = vld [vmem:[%s1 + $0x10] sm:$0xff]
  %v309 = vld [vmem:[%s1 + $0x18] sm:$0xff]
  %v310 = vld [vmem:[%s1 + $0x20] sm:$0xff]
  %v311 = vld [vmem:[%s1 + $0x28] sm:$0xff]
  %v312 = vld [vmem:[%s1 + $0x30] sm:$0xff]
  %v313 = vld [vmem:[%s1 + $0x38] sm:$0xff]
  %v314 = vld [vmem:[%s1 + $0x40] sm:$0xff]
  %v315 = vld [vmem:[%s1 + $0x48] sm:$0xff]
  %v316 = vld [vmem:[%s1 + $0x50] sm:$0xff]
  %v317 = vld [vmem:[%s1 + $0x58] sm:$0xff]
  %v318 = vld [vmem:[%s1 + $0x60] sm:$0xff]
  %v319 = vld [vmem:[%s1 + $0x68] sm:$0xff]
  %v320 = vld [vmem:[%s1 + $0x70] sm:$0xff]
  %v321 = vld [vmem:[%s1 + $0x78] sm:$0xff]
  %v322 = vld [vmem:[%s1 + $0x80] sm:$0xff]
  %v323 = vld [vmem:[%s1 + $0x88] sm:$0xff]
  %v324 = vld [vmem:[%s1 + $0x90] sm:$0xff]
  %v325 = vld [vmem:[%s1 + $0x98] sm:$0xff]
  %v326 = vld [vmem:[%s1 + $0xa0] sm:$0xff]
  %v327 = vld [vmem:[%s1 + $0xa8] sm:$0xff]
  %v328 = vld [vmem:[%s1 + $0xb0] sm:$0xff]
  %v329 = vld [vmem:[%s1 + $0xb8] sm:$0xff]
  %v330 = vld [vmem:[%s1 + $0xc0] sm:$0xff]
  %v331 = vld [vmem:[%s1 + $0xc8] sm:$0xff]
  %v332 = vld [vmem:[%s1 + $0xd0] sm:$0xff]
  %v333 = vld [vmem:[%s1 + $0xd8] sm:$0xff]
  %v334 = vld [vmem:[%s1 + $0xe0] sm:$0xff]
  %v335 = vld [vmem:[%s1 + $0xe8] sm:$0xff]
  %v336 = vld [vmem:[%s1 + $0xf0] sm:$0xff]
  %v337 = vld [vmem:[%s1 + $0xf8] sm:$0xff]
  %v338 = vld [vmem:[%s1 + $0x100] sm:$0xff]
  %v339 = vld [vmem:[%s1 + $0x108] sm:$0xff]
  %v340 = vld [vmem:[%s1 + $0x110] sm:$0xff]
  %v341 = vld [vmem:[%s1 + $0x118] sm:$0xff]
  %v342 = vld [vmem:[%s1 + $0x120] sm:$0xff]
  %v343 = vld [vmem:[%s1 + $0x128] sm:$0xff]
  %v344 = vld [vmem:[%s1 + $0x130] sm:$0xff]
  %v345 = vld [vmem:[%s1 + $0x138] sm:$0xff]
  %v346 = vld [vmem:[%s1 + $0x140] sm:$0xff]
  %v347 = vld [vmem:[%s1 + $0x148] sm:$0xff]
  %v348 = vld [vmem:[%s1 + $0x150] sm:$0xff]
  %v349 = vld [vmem:[%s1 + $0x158] sm:$0xff]
  %v350 = vld [vmem:[%s1 + $0x160] sm:$0xff]
  %v351 = vld [vmem:[%s1 + $0x168] sm:$0xff]
  %v352 = vld [vmem:[%s1 + $0x170] sm:$0xff]
  %v353 = vld [vmem:[%s1 + $0x178] sm:$0xff]
  %v354 = vld [vmem:[%s1 + $0x180] sm:$0xff]
  %v355 = vld [vmem:[%s1 + $0x188] sm:$0xff]
  %v356 = vld [vmem:[%s1 + $0x190] sm:$0xff]
  %v357 = vld [vmem:[%s1 + $0x198] sm:$0xff]
  %v358 = vld [vmem:[%s1 + $0x1a0] sm:$0xff]
  %v359 = vld [vmem:[%s1 + $0x1a8] sm:$0xff]
  %v360 = vld [vmem:[%s1 + $0x1b0] sm:$0xff]
  %v361 = vld [vmem:[%s1 + $0x1b8] sm:$0xff]
  %v362 = vld [vmem:[%s1 + $0x1c0] sm:$0xff]
  %v363 = vld [vmem:[%s1 + $0x1c8] sm:$0xff]
  %v364 = vld [vmem:[%s1 + $0x1d0] sm:$0xff]
  %v365 = vld [vmem:[%s1 + $0x1d8] sm:$0xff]
  %v366 = vld [vmem:[%s1 + $0x1e0] sm:$0xff]
  %v367 = vld [vmem:[%s1 + $0x1e8] sm:$0xff]
  %v368 = vld [vmem:[%s1 + $0x1f0] sm:$0xff]
  %v369 = vld [vmem:[%s1 + $0x1f8] sm:$0xff]
  %v370 = vld [vmem:[%s1 + $0x200] sm:$0xff]
  %v371 = vld [vmem:[%s1 + $0x208] sm:$0xff]
  %v372 = vld [vmem:[%s1 + $0x210] sm:$0xff]
  %v373 = vld [vmem:[%s1 + $0x218] sm:$0xff]
  %v374 = vld [vmem:[%s1 + $0x220] sm:$0xff]
  %v375 = vld [vmem:[%s1 + $0x228] sm:$0xff]
  %v376 = vld [vmem:[%s1 + $0x230] sm:$0xff]
  %v377 = vld [vmem:[%s1 + $0x238] sm:$0xff]
  %v378 = vld [vmem:[%s1 + $0x240] sm:$0xff]
  %v379 = vld [vmem:[%s1 + $0x248] sm:$0xff]
  %v380 = vld [vmem:[%s1 + $0x250] sm:$0xff]
  %v381 = vld [vmem:[%s1 + $0x258] sm:$0xff]
  %v382 = vld [vmem:[%s1 + $0x260] sm:$0xff]
  %v383 = vld [vmem:[%s1 + $0x268] sm:$0xff]
  %v384 = vld [vmem:[%s1 + $0x270] sm:$0xff]
  %v385 = vld [vmem:[%s1 + $0x278] sm:$0xff]
  %v386 = vld [vmem:[%s1 + $0x280] sm:$0xff]
  %v387 = vld [vmem:[%s1 + $0x288] sm:$0xff]
  %v388 = vld [vmem:[%s1 + $0x290] sm:$0xff]
  %v389 = vld [vmem:[%s1 + $0x298] sm:$0xff]
  %v390 = vld [vmem:[%s1 + $0x2a0] sm:$0xff]
  %v391 = vld [vmem:[%s1 + $0x2a8] sm:$0xff]
  %v392 = vld [vmem:[%s1 + $0x2b0] sm:$0xff]
  %v393 = vld [vmem:[%s1 + $0x2b8] sm:$0xff]
  %v394 = vld [vmem:[%s1 + $0x2c0] sm:$0xff]
  %v395 = vld [vmem:[%s1 + $0x2c8] sm:$0xff]
  %v396 = vld [vmem:[%s1 + $0x2d0] sm:$0xff]
  %v397 = vld [vmem:[%s1 + $0x2d8] sm:$0xff]
  %v398 = vld [vmem:[%s1 + $0x2e0] sm:$0xff]
  %v399 = vld [vmem:[%s1 + $0x2e8] sm:$0xff]
  %v400 = vld [vmem:[%s1 + $0x2f0] sm:$0xff]
  %v401 = vld [vmem:[%s1 + $0x2f8] sm:$0xff]
  %v402 = vld [vmem:[%s1 + $0x300] sm:$0xff]
  %v403 = vld [vmem:[%s1 + $0x308] sm:$0xff]
  %v404 = vld [vmem:[%s1 + $0x310] sm:$0xff]
  %v405 = vld [vmem:[%s1 + $0x318] sm:$0xff]
  %v406 = vld [vmem:[%s1 + $0x320] sm:$0xff]
  %v407 = vld [vmem:[%s1 + $0x328] sm:$0xff]
  %v408 = vld [vmem:[%s1 + $0x330] sm:$0xff]
  %v409 = vld [vmem:[%s1 + $0x338] sm:$0xff]
  %v410 = vld [vmem:[%s1 + $0x340] sm:$0xff]
  %v411 = vld [vmem:[%s1 + $0x348] sm:$0xff]
  %v412 = vld [vmem:[%s1 + $0x350] sm:$0xff]
  %v413 = vld [vmem:[%s1 + $0x358] sm:$0xff]
  %v414 = vld [vmem:[%s1 + $0x360] sm:$0xff]
  %v415 = vld [vmem:[%s1 + $0x368] sm:$0xff]
  %v416 = vld [vmem:[%s1 + $0x370] sm:$0xff]
  %v417 = vld [vmem:[%s1 + $0x378] sm:$0xff]
  %v418 = vld [vmem:[%s1 + $0x380] sm:$0xff]
  %v419 = vld [vmem:[%s1 + $0x388] sm:$0xff]
  %v420 = vld [vmem:[%s1 + $0x390] sm:$0xff]
  %v421 = vld [vmem:[%s1 + $0x398] sm:$0xff]
  %v422 = vld [vmem:[%s1 + $0x3a0] sm:$0xff]
  %v423 = vld [vmem:[%s1 + $0x3a8] sm:$0xff]
  %v424 = vld [vmem:[%s1 + $0x3b0] sm:$0xff]
  %v425 = vld [vmem:[%s1 + $0x3b8] sm:$0xff]
  %v426 = vld [vmem:[%s1 + $0x3c0] sm:$0xff]
  %v427 = vld [vmem:[%s1 + $0x3c8] sm:$0xff]
  %v428 = vld [vmem:[%s1 + $0x3d0] sm:$0xff]
  %v429 = vld [vmem:[%s1 + $0x3d8] sm:$0xff]
  %v430 = vld [vmem:[%s1 + $0x3e0] sm:$0xff]
  %v431 = vld [vmem:[%s1 + $0x3e8] sm:$0xff]
  %v432 = vld [vmem:[%s1 + $0x3f0] sm:$0xff]
  %v433 = vld [vmem:[%s1 + $0x3f8] sm:$0xff]
  %v434 = vld [vmem:[%s1 + $0x400] sm:$0xff]
  %v435 = vld [vmem:[%s1 + $0x408] sm:$0xff]
  %v436 = vld [vmem:[%s1 + $0x410] sm:$0xff]
  %v437 = vld [vmem:[%s1 + $0x418] sm:$0xff]
  %v438 = vld [vmem:[%s1 + $0x420] sm:$0xff]
  %v439 = vld [vmem:[%s1 + $0x428] sm:$0xff]
  %v440 = vld [vmem:[%s1 + $0x430] sm:$0xff]
  %v441 = vld [vmem:[%s1 + $0x438] sm:$0xff]
  %v442 = vld [vmem:[%s1 + $0x440] sm:$0xff]
  %v443 = vld [vmem:[%s1 + $0x448] sm:$0xff]
  %v444 = vld [vmem:[%s1 + $0x450] sm:$0xff]
  %v445 = vld [vmem:[%s1 + $0x458] sm:$0xff]
  %v446 = vld [vmem:[%s1 + $0x460] sm:$0xff]
  %v447 = vld [vmem:[%s1 + $0x468] sm:$0xff]
  %v448 = vld [vmem:[%s1 + $0x470] sm:$0xff]
  %v449 = vld [vmem:[%s1 + $0x478] sm:$0xff]
  %v450 = vld [vmem:[%s1 + $0x480] sm:$0xff]
  %v451 = vld [vmem:[%s1 + $0x488] sm:$0xff]
  %v452 = vld [vmem:[%s1 + $0x490] sm:$0xff]
  %v453 = vld [vmem:[%s1 + $0x498] sm:$0xff]
  %v454 = vld [vmem:[%s1 + $0x4a0] sm:$0xff]
  %v455 = vld [vmem:[%s1 + $0x4a8] sm:$0xff]
  %v456 = vld [vmem:[%s1 + $0x4b0] sm:$0xff]
  %v457 = vld [vmem:[%s1 + $0x4b8] sm:$0xff]
  %v458 = vld [vmem:[%s1 + $0x4c0] sm:$0xff]
  %v459 = vld [vmem:[%s1 + $0x4c8] sm:$0xff]
  %v460 = vld [vmem:[%s1 + $0x4d0] sm:$0xff]
  %v461 = vld [vmem:[%s1 + $0x4d8] sm:$0xff]
  %v462 = vld [vmem:[%s1 + $0x4e0] sm:$0xff]
  %v463 = vld [vmem:[%s1 + $0x4e8] sm:$0xff]
  %v464 = vld [vmem:[%s1 + $0x4f0] sm:$0xff]
  %v465 = vld [vmem:[%s1 + $0x4f8] sm:$0xff]
  %v466 = vld [vmem:[%s1 + $0x500] sm:$0xff]
  %v467 = vld [vmem:[%s1 + $0x508] sm:$0xff]
  %v468 = vld [vmem:[%s1 + $0x510] sm:$0xff]
  %v469 = vld [vmem:[%s1 + $0x518] sm:$0xff]
  %v470 = vld [vmem:[%s1 + $0x520] sm:$0xff]
  %v471 = vld [vmem:[%s1 + $0x528] sm:$0xff]
  %v472 = vld [vmem:[%s1 + $0x530] sm:$0xff]
  %v473 = vld [vmem:[%s1 + $0x538] sm:$0xff]
  %v474 = vld [vmem:[%s1 + $0x540] sm:$0xff]
  %v475 = vld [vmem:[%s1 + $0x548] sm:$0xff]
  %v476 = vld [vmem:[%s1 + $0x550] sm:$0xff]
  %v477 = vld [vmem:[%s1 + $0x558] sm:$0xff]
  %v478 = vld [vmem:[%s1 + $0x560] sm:$0xff]
  %v479 = vld [vmem:[%s1 + $0x568] sm:$0xff]
  %v480 = vld [vmem:[%s1 + $0x570] sm:$0xff]
  %v481 = vld [vmem:[%s1 + $0x578] sm:$0xff]
  %v482 = vld [vmem:[%s1 + $0x580] sm:$0xff]
  %v483 = vld [vmem:[%s1 + $0x588] sm:$0xff]
  %v484 = vld [vmem:[%s1 + $0x590] sm:$0xff]
  %v485 = vld [vmem:[%s1 + $0x598] sm:$0xff]
  %v486 = vld [vmem:[%s1 + $0x5a0] sm:$0xff]
  %v487 = vld [vmem:[%s1 + $0x5a8] sm:$0xff]
  %v488 = vld [vmem:[%s1 + $0x5b0] sm:$0xff]
  %v489 = vld [vmem:[%s1 + $0x5b8] sm:$0xff]
  %v490 = vld [vmem:[%s1 + $0x5c0] sm:$0xff]
  %v491 = vld [vmem:[%s1 + $0x5c8] sm:$0xff]
  %v492 = vld [vmem:[%s1 + $0x5d0] sm:$0xff]
  %v493 = vld [vmem:[%s1 + $0x5d8] sm:$0xff]
  %v494 = vld [vmem:[%s1 + $0x5e0] sm:$0xff]
  %v495 = vld [vmem:[%s1 + $0x5e8] sm:$0xff]
  %v496 = vld [vmem:[%s1 + $0x5f0] sm:$0xff]
  %v497 = vld [vmem:[%s1 + $0x5f8] sm:$0xff]
  %v690 = vunpack.c.l.b16 %v306
  %v691 = vunpack.c.h.b16 %v306
  %v692 = vunpack.c.l.b16 %v307
  %v693 = vunpack.c.h.b16 %v307
  %v694 = vunpack.c.l.b16 %v308
  %v695 = vunpack.c.h.b16 %v308
  %v696 = vunpack.c.l.b16 %v309
  %v697 = vunpack.c.h.b16 %v309
  %v698 = vunpack.c.l.b16 %v310
  %v699 = vunpack.c.h.b16 %v310
  %v700 = vunpack.c.l.b16 %v311
  %v701 = vunpack.c.h.b16 %v311
  %v702 = vunpack.c.l.b16 %v312
  %v703 = vunpack.c.h.b16 %v312
  %v704 = vunpack.c.l.b16 %v313
  %v705 = vunpack.c.h.b16 %v313
  %v706 = vunpack.c.l.b16 %v314
  %v707 = vunpack.c.h.b16 %v314
  %v708 = vunpack.c.l.b16 %v315
  %v709 = vunpack.c.h.b16 %v315
  %v710 = vunpack.c.l.b16 %v316
  %v711 = vunpack.c.h.b16 %v316
  %v712 = vunpack.c.l.b16 %v317
  %v713 = vunpack.c.h.b16 %v317
  %v714 = vunpack.c.l.b16 %v318
  %v715 = vunpack.c.h.b16 %v318
  %v716 = vunpack.c.l.b16 %v319
  %v717 = vunpack.c.h.b16 %v319
  %v718 = vunpack.c.l.b16 %v320
  %v719 = vunpack.c.h.b16 %v320
  %v720 = vunpack.c.l.b16 %v321
  %v721 = vunpack.c.h.b16 %v321
  %v722 = vunpack.c.l.b16 %v322
  %v723 = vunpack.c.h.b16 %v322
  %v724 = vunpack.c.l.b16 %v323
  %v725 = vunpack.c.h.b16 %v323
  %v726 = vunpack.c.l.b16 %v324
  %v727 = vunpack.c.h.b16 %v324
  %v728 = vunpack.c.l.b16 %v325
  %v729 = vunpack.c.h.b16 %v325
  %v730 = vunpack.c.l.b16 %v326
  %v731 = vunpack.c.h.b16 %v326
  %v732 = vunpack.c.l.b16 %v327
  %v733 = vunpack.c.h.b16 %v327
  %v734 = vunpack.c.l.b16 %v328
  %v735 = vunpack.c.h.b16 %v328
  %v736 = vunpack.c.l.b16 %v329
  %v737 = vunpack.c.h.b16 %v329
  %v738 = vunpack.c.l.b16 %v330
  %v739 = vunpack.c.h.b16 %v330
  %v740 = vunpack.c.l.b16 %v331
  %v741 = vunpack.c.h.b16 %v331
  %v742 = vunpack.c.l.b16 %v332
  %v743 = vunpack.c.h.b16 %v332
  %v744 = vunpack.c.l.b16 %v333
  %v745 = vunpack.c.h.b16 %v333
  %v746 = vunpack.c.l.b16 %v334
  %v747 = vunpack.c.h.b16 %v334
  %v748 = vunpack.c.l.b16 %v335
  %v749 = vunpack.c.h.b16 %v335
  %v750 = vunpack.c.l.b16 %v336
  %v751 = vunpack.c.h.b16 %v336
  %v752 = vunpack.c.l.b16 %v337
  %v753 = vunpack.c.h.b16 %v337
  %v754 = vunpack.c.l.b16 %v338
  %v755 = vunpack.c.h.b16 %v338
  %v756 = vunpack.c.l.b16 %v339
  %v757 = vunpack.c.h.b16 %v339
  %v758 = vunpack.c.l.b16 %v340
  %v759 = vunpack.c.h.b16 %v340
  %v760 = vunpack.c.l.b16 %v341
  %v761 = vunpack.c.h.b16 %v341
  %v762 = vunpack.c.l.b16 %v342
  %v763 = vunpack.c.h.b16 %v342
  %v764 = vunpack.c.l.b16 %v343
  %v765 = vunpack.c.h.b16 %v343
  %v766 = vunpack.c.l.b16 %v344
  %v767 = vunpack.c.h.b16 %v344
  %v768 = vunpack.c.l.b16 %v345
  %v769 = vunpack.c.h.b16 %v345
  %v770 = vunpack.c.l.b16 %v346
  %v771 = vunpack.c.h.b16 %v346
  %v772 = vunpack.c.l.b16 %v347
  %v773 = vunpack.c.h.b16 %v347
  %v774 = vunpack.c.l.b16 %v348
  %v775 = vunpack.c.h.b16 %v348
  %v776 = vunpack.c.l.b16 %v349
  %v777 = vunpack.c.h.b16 %v349
  %v778 = vunpack.c.l.b16 %v350
  %v779 = vunpack.c.h.b16 %v350
  %v780 = vunpack.c.l.b16 %v351
  %v781 = vunpack.c.h.b16 %v351
  %v782 = vunpack.c.l.b16 %v352
  %v783 = vunpack.c.h.b16 %v352
  %v784 = vunpack.c.l.b16 %v353
  %v785 = vunpack.c.h.b16 %v353
  %v786 = vunpack.c.l.b16 %v354
  %v787 = vunpack.c.h.b16 %v354
  %v788 = vunpack.c.l.b16 %v355
  %v789 = vunpack.c.h.b16 %v355
  %v790 = vunpack.c.l.b16 %v356
  %v791 = vunpack.c.h.b16 %v356
  %v792 = vunpack.c.l.b16 %v357
  %v793 = vunpack.c.h.b16 %v357
  %v794 = vunpack.c.l.b16 %v358
  %v795 = vunpack.c.h.b16 %v358
  %v796 = vunpack.c.l.b16 %v359
  %v797 = vunpack.c.h.b16 %v359
  %v798 = vunpack.c.l.b16 %v360
  %v799 = vunpack.c.h.b16 %v360
  %v800 = vunpack.c.l.b16 %v361
  %v801 = vunpack.c.h.b16 %v361
  %v802 = vunpack.c.l.b16 %v362
  %v803 = vunpack.c.h.b16 %v362
  %v804 = vunpack.c.l.b16 %v363
  %v805 = vunpack.c.h.b16 %v363
  %v806 = vunpack.c.l.b16 %v364
  %v807 = vunpack.c.h.b16 %v364
  %v808 = vunpack.c.l.b16 %v365
  %v809 = vunpack.c.h.b16 %v365
  %v810 = vunpack.c.l.b16 %v366
  %v811 = vunpack.c.h.b16 %v366
  %v812 = vunpack.c.l.b16 %v367
  %v813 = vunpack.c.h.b16 %v367
  %v814 = vunpack.c.l.b16 %v368
  %v815 = vunpack.c.h.b16 %v368
  %v816 = vunpack.c.l.b16 %v369
  %v817 = vunpack.c.h.b16 %v369
  %v818 = vunpack.c.l.b16 %v370
  %v819 = vunpack.c.h.b16 %v370
  %v820 = vunpack.c.l.b16 %v371
  %v821 = vunpack.c.h.b16 %v371
  %v822 = vunpack.c.l.b16 %v372
  %v823 = vunpack.c.h.b16 %v372
  %v824 = vunpack.c.l.b16 %v373
  %v825 = vunpack.c.h.b16 %v373
  %v826 = vunpack.c.l.b16 %v374
  %v827 = vunpack.c.h.b16 %v374
  %v828 = vunpack.c.l.b16 %v375
  %v829 = vunpack.c.h.b16 %v375
  %v830 = vunpack.c.l.b16 %v376
  %v831 = vunpack.c.h.b16 %v376
  %v832 = vunpack.c.l.b16 %v377
  %v833 = vunpack.c.h.b16 %v377
  %v834 = vunpack.c.l.b16 %v378
  %v835 = vunpack.c.h.b16 %v378
  %v836 = vunpack.c.l.b16 %v379
  %v837 = vunpack.c.h.b16 %v379
  %v838 = vunpack.c.l.b16 %v380
  %v839 = vunpack.c.h.b16 %v380
  %v840 = vunpack.c.l.b16 %v381
  %v841 = vunpack.c.h.b16 %v381
  %v842 = vunpack.c.l.b16 %v382
  %v843 = vunpack.c.h.b16 %v382
  %v844 = vunpack.c.l.b16 %v383
  %v845 = vunpack.c.h.b16 %v383
  %v846 = vunpack.c.l.b16 %v384
  %v847 = vunpack.c.h.b16 %v384
  %v848 = vunpack.c.l.b16 %v385
  %v849 = vunpack.c.h.b16 %v385
  %v850 = vunpack.c.l.b16 %v386
  %v851 = vunpack.c.h.b16 %v386
  %v852 = vunpack.c.l.b16 %v387
  %v853 = vunpack.c.h.b16 %v387
  %v854 = vunpack.c.l.b16 %v388
  %v855 = vunpack.c.h.b16 %v388
  %v856 = vunpack.c.l.b16 %v389
  %v857 = vunpack.c.h.b16 %v389
  %v858 = vunpack.c.l.b16 %v390
  %v859 = vunpack.c.h.b16 %v390
  %v860 = vunpack.c.l.b16 %v391
  %v861 = vunpack.c.h.b16 %v391
  %v862 = vunpack.c.l.b16 %v392
  %v863 = vunpack.c.h.b16 %v392
  %v864 = vunpack.c.l.b16 %v393
  %v865 = vunpack.c.h.b16 %v393
  %v866 = vunpack.c.l.b16 %v394
  %v867 = vunpack.c.h.b16 %v394
  %v868 = vunpack.c.l.b16 %v395
  %v869 = vunpack.c.h.b16 %v395
  %v870 = vunpack.c.l.b16 %v396
  %v871 = vunpack.c.h.b16 %v396
  %v872 = vunpack.c.l.b16 %v397
  %v873 = vunpack.c.h.b16 %v397
  %v874 = vunpack.c.l.b16 %v398
  %v875 = vunpack.c.h.b16 %v398
  %v876 = vunpack.c.l.b16 %v399
  %v877 = vunpack.c.h.b16 %v399
  %v878 = vunpack.c.l.b16 %v400
  %v879 = vunpack.c.h.b16 %v400
  %v880 = vunpack.c.l.b16 %v401
  %v881 = vunpack.c.h.b16 %v401
  %v882 = vunpack.c.l.b16 %v402
  %v883 = vunpack.c.h.b16 %v402
  %v884 = vunpack.c.l.b16 %v403
  %v885 = vunpack.c.h.b16 %v403
  %v886 = vunpack.c.l.b16 %v404
  %v887 = vunpack.c.h.b16 %v404
  %v888 = vunpack.c.l.b16 %v405
  %v889 = vunpack.c.h.b16 %v405
  %v890 = vunpack.c.l.b16 %v406
  %v891 = vunpack.c.h.b16 %v406
  %v892 = vunpack.c.l.b16 %v407
  %v893 = vunpack.c.h.b16 %v407
  %v894 = vunpack.c.l.b16 %v408
  %v895 = vunpack.c.h.b16 %v408
  %v896 = vunpack.c.l.b16 %v409
  %v897 = vunpack.c.h.b16 %v409
  %v898 = vunpack.c.l.b16 %v410
  %v899 = vunpack.c.h.b16 %v410
  %v900 = vunpack.c.l.b16 %v411
  %v901 = vunpack.c.h.b16 %v411
  %v902 = vunpack.c.l.b16 %v412
  %v903 = vunpack.c.h.b16 %v412
  %v904 = vunpack.c.l.b16 %v413
  %v905 = vunpack.c.h.b16 %v413
  %v906 = vunpack.c.l.b16 %v414
  %v907 = vunpack.c.h.b16 %v414
  %v908 = vunpack.c.l.b16 %v415
  %v909 = vunpack.c.h.b16 %v415
  %v910 = vunpack.c.l.b16 %v416
  %v911 = vunpack.c.h.b16 %v416
  %v912 = vunpack.c.l.b16 %v417
  %v913 = vunpack.c.h.b16 %v417
  %v914 = vunpack.c.l.b16 %v418
  %v915 = vunpack.c.h.b16 %v418
  %v916 = vunpack.c.l.b16 %v419
  %v917 = vunpack.c.h.b16 %v419
  %v918 = vunpack.c.l.b16 %v420
  %v919 = vunpack.c.h.b16 %v420
  %v920 = vunpack.c.l.b16 %v421
  %v921 = vunpack.c.h.b16 %v421
  %v922 = vunpack.c.l.b16 %v422
  %v923 = vunpack.c.h.b16 %v422
  %v924 = vunpack.c.l.b16 %v423
  %v925 = vunpack.c.h.b16 %v423
  %v926 = vunpack.c.l.b16 %v424
  %v927 = vunpack.c.h.b16 %v424
  %v928 = vunpack.c.l.b16 %v425
  %v929 = vunpack.c.h.b16 %v425
  %v930 = vunpack.c.l.b16 %v426
  %v931 = vunpack.c.h.b16 %v426
  %v932 = vunpack.c.l.b16 %v427
  %v933 = vunpack.c.h.b16 %v427
  %v934 = vunpack.c.l.b16 %v428
  %v935 = vunpack.c.h.b16 %v428
  %v936 = vunpack.c.l.b16 %v429
  %v937 = vunpack.c.h.b16 %v429
  %v938 = vunpack.c.l.b16 %v430
  %v939 = vunpack.c.h.b16 %v430
  %v940 = vunpack.c.l.b16 %v431
  %v941 = vunpack.c.h.b16 %v431
  %v942 = vunpack.c.l.b16 %v432
  %v943 = vunpack.c.h.b16 %v432
  %v944 = vunpack.c.l.b16 %v433
  %v945 = vunpack.c.h.b16 %v433
  %v946 = vunpack.c.l.b16 %v434
  %v947 = vunpack.c.h.b16 %v434
  %v948 = vunpack.c.l.b16 %v435
  %v949 = vunpack.c.h.b16 %v435
  %v950 = vunpack.c.l.b16 %v436
  %v951 = vunpack.c.h.b16 %v436
  %v952 = vunpack.c.l.b16 %v437
  %v953 = vunpack.c.h.b16 %v437
  %v954 = vunpack.c.l.b16 %v438
  %v955 = vunpack.c.h.b16 %v438
  %v956 = vunpack.c.l.b16 %v439
  %v957 = vunpack.c.h.b16 %v439
  %v958 = vunpack.c.l.b16 %v440
  %v959 = vunpack.c.h.b16 %v440
  %v960 = vunpack.c.l.b16 %v441
  %v961 = vunpack.c.h.b16 %v441
  %v962 = vunpack.c.l.b16 %v442
  %v963 = vunpack.c.h.b16 %v442
  %v964 = vunpack.c.l.b16 %v443
  %v965 = vunpack.c.h.b16 %v443
  %v966 = vunpack.c.l.b16 %v444
  %v967 = vunpack.c.h.b16 %v444
  %v968 = vunpack.c.l.b16 %v445
  %v969 = vunpack.c.h.b16 %v445
  %v970 = vunpack.c.l.b16 %v446
  %v971 = vunpack.c.h.b16 %v446
  %v972 = vunpack.c.l.b16 %v447
  %v973 = vunpack.c.h.b16 %v447
  %v974 = vunpack.c.l.b16 %v448
  %v975 = vunpack.c.h.b16 %v448
  %v976 = vunpack.c.l.b16 %v449
  %v977 = vunpack.c.h.b16 %v449
  %v978 = vunpack.c.l.b16 %v450
  %v979 = vunpack.c.h.b16 %v450
  %v980 = vunpack.c.l.b16 %v451
  %v981 = vunpack.c.h.b16 %v451
  %v982 = vunpack.c.l.b16 %v452
  %v983 = vunpack.c.h.b16 %v452
  %v984 = vunpack.c.l.b16 %v453
  %v985 = vunpack.c.h.b16 %v453
  %v986 = vunpack.c.l.b16 %v454
  %v987 = vunpack.c.h.b16 %v454
  %v988 = vunpack.c.l.b16 %v455
  %v989 = vunpack.c.h.b16 %v455
  %v990 = vunpack.c.l.b16 %v456
  %v991 = vunpack.c.h.b16 %v456
  %v992 = vunpack.c.l.b16 %v457
  %v993 = vunpack.c.h.b16 %v457
  %v994 = vunpack.c.l.b16 %v458
  %v995 = vunpack.c.h.b16 %v458
  %v996 = vunpack.c.l.b16 %v459
  %v997 = vunpack.c.h.b16 %v459
  %v998 = vunpack.c.l.b16 %v460
  %v999 = vunpack.c.h.b16 %v460
  %v1000 = vunpack.c.l.b16 %v461
  %v1001 = vunpack.c.h.b16 %v461
  %v1002 = vunpack.c.l.b16 %v462
  %v1003 = vunpack.c.h.b16 %v462
  %v1004 = vunpack.c.l.b16 %v463
  %v1005 = vunpack.c.h.b16 %v463
  %v1006 = vunpack.c.l.b16 %v464
  %v1007 = vunpack.c.h.b16 %v464
  %v1008 = vunpack.c.l.b16 %v465
  %v1009 = vunpack.c.h.b16 %v465
  %v1010 = vunpack.c.l.b16 %v466
  %v1011 = vunpack.c.h.b16 %v466
  %v1012 = vunpack.c.l.b16 %v467
  %v1013 = vunpack.c.h.b16 %v467
  %v1014 = vunpack.c.l.b16 %v468
  %v1015 = vunpack.c.h.b16 %v468
  %v1016 = vunpack.c.l.b16 %v469
  %v1017 = vunpack.c.h.b16 %v469
  %v1018 = vunpack.c.l.b16 %v470
  %v1019 = vunpack.c.h.b16 %v470
  %v1020 = vunpack.c.l.b16 %v471
  %v1021 = vunpack.c.h.b16 %v471
  %v1022 = vunpack.c.l.b16 %v472
  %v1023 = vunpack.c.h.b16 %v472
  %v1024 = vunpack.c.l.b16 %v473
  %v1025 = vunpack.c.h.b16 %v473
  %v1026 = vunpack.c.l.b16 %v474
  %v1027 = vunpack.c.h.b16 %v474
  %v1028 = vunpack.c.l.b16 %v475
  %v1029 = vunpack.c.h.b16 %v475
  %v1030 = vunpack.c.l.b16 %v476
  %v1031 = vunpack.c.h.b16 %v476
  %v1032 = vunpack.c.l.b16 %v477
  %v1033 = vunpack.c.h.b16 %v477
  %v1034 = vunpack.c.l.b16 %v478
  %v1035 = vunpack.c.h.b16 %v478
  %v1036 = vunpack.c.l.b16 %v479
  %v1037 = vunpack.c.h.b16 %v479
  %v1038 = vunpack.c.l.b16 %v480
  %v1039 = vunpack.c.h.b16 %v480
  %v1040 = vunpack.c.l.b16 %v481
  %v1041 = vunpack.c.h.b16 %v481
  %v1042 = vunpack.c.l.b16 %v482
  %v1043 = vunpack.c.h.b16 %v482
  %v1044 = vunpack.c.l.b16 %v483
  %v1045 = vunpack.c.h.b16 %v483
  %v1046 = vunpack.c.l.b16 %v484
  %v1047 = vunpack.c.h.b16 %v484
  %v1048 = vunpack.c.l.b16 %v485
  %v1049 = vunpack.c.h.b16 %v485
  %v1050 = vunpack.c.l.b16 %v486
  %v1051 = vunpack.c.h.b16 %v486
  %v1052 = vunpack.c.l.b16 %v487
  %v1053 = vunpack.c.h.b16 %v487
  %v1054 = vunpack.c.l.b16 %v488
  %v1055 = vunpack.c.h.b16 %v488
  %v1056 = vunpack.c.l.b16 %v489
  %v1057 = vunpack.c.h.b16 %v489
  %v1058 = vunpack.c.l.b16 %v490
  %v1059 = vunpack.c.h.b16 %v490
  %v1060 = vunpack.c.l.b16 %v491
  %v1061 = vunpack.c.h.b16 %v491
  %v1062 = vunpack.c.l.b16 %v492
  %v1063 = vunpack.c.h.b16 %v492
  %v1064 = vunpack.c.l.b16 %v493
  %v1065 = vunpack.c.h.b16 %v493
  %v1066 = vunpack.c.l.b16 %v494
  %v1067 = vunpack.c.h.b16 %v494
  %v1068 = vunpack.c.l.b16 %v495
  %v1069 = vunpack.c.h.b16 %v495
  %v1070 = vunpack.c.l.b16 %v496
  %v1071 = vunpack.c.h.b16 %v496
  %v1072 = vunpack.c.l.b16 %v497
  %v1073 = vunpack.c.h.b16 %v497
  %v1074 = vpack.c.b16 %v702, %v690
  %v1075 = vpack.c.b16 %v703, %v691
  %v1076 = vpack.c.b16 %v704, %v692
  %v1077 = vpack.c.b16 %v705, %v693
  %v1078 = vpack.c.b16 %v706, %v694
  %v1079 = vpack.c.b16 %v707, %v695
  %v1080 = vpack.c.b16 %v708, %v696
  %v1081 = vpack.c.b16 %v709, %v697
  %v1082 = vpack.c.b16 %v710, %v698
  %v1083 = vpack.c.b16 %v711, %v699
  %v1084 = vpack.c.b16 %v712, %v700
  %v1085 = vpack.c.b16 %v713, %v701
  %v1086 = vpack.c.b16 %v726, %v714
  %v1087 = vpack.c.b16 %v727, %v715
  %v1088 = vpack.c.b16 %v728, %v716
  %v1089 = vpack.c.b16 %v729, %v717
  %v1090 = vpack.c.b16 %v730, %v718
  %v1091 = vpack.c.b16 %v731, %v719
  %v1092 = vpack.c.b16 %v732, %v720
  %v1093 = vpack.c.b16 %v733, %v721
  %v1094 = vpack.c.b16 %v734, %v722
  %v1095 = vpack.c.b16 %v735, %v723
  %v1096 = vpack.c.b16 %v736, %v724
  %v1097 = vpack.c.b16 %v737, %v725
  %v1098 = vpack.c.b16 %v750, %v738
  %v1099 = vpack.c.b16 %v751, %v739
  %v1100 = vpack.c.b16 %v752, %v740
  %v1101 = vpack.c.b16 %v753, %v741
  %v1102 = vpack.c.b16 %v754, %v742
  %v1103 = vpack.c.b16 %v755, %v743
  %v1104 = vpack.c.b16 %v756, %v744
  %v1105 = vpack.c.b16 %v757, %v745
  %v1106 = vpack.c.b16 %v758, %v746
  %v1107 = vpack.c.b16 %v759, %v747
  %v1108 = vpack.c.b16 %v760, %v748
  %v1109 = vpack.c.b16 %v761, %v749
  %v1110 = vpack.c.b16 %v774, %v762
  %v1111 = vpack.c.b16 %v775, %v763
  %v1112 = vpack.c.b16 %v776, %v764
  %v1113 = vpack.c.b16 %v777, %v765
  %v1114 = vpack.c.b16 %v778, %v766
  %v1115 = vpack.c.b16 %v779, %v767
  %v1116 = vpack.c.b16 %v780, %v768
  %v1117 = vpack.c.b16 %v781, %v769
  %v1118 = vpack.c.b16 %v782, %v770
  %v1119 = vpack.c.b16 %v783, %v771
  %v1120 = vpack.c.b16 %v784, %v772
  %v1121 = vpack.c.b16 %v785, %v773
  %v1122 = vpack.c.b16 %v798, %v786
  %v1123 = vpack.c.b16 %v799, %v787
  %v1124 = vpack.c.b16 %v800, %v788
  %v1125 = vpack.c.b16 %v801, %v789
  %v1126 = vpack.c.b16 %v802, %v790
  %v1127 = vpack.c.b16 %v803, %v791
  %v1128 = vpack.c.b16 %v804, %v792
  %v1129 = vpack.c.b16 %v805, %v793
  %v1130 = vpack.c.b16 %v806, %v794
  %v1131 = vpack.c.b16 %v807, %v795
  %v1132 = vpack.c.b16 %v808, %v796
  %v1133 = vpack.c.b16 %v809, %v797
  %v1134 = vpack.c.b16 %v822, %v810
  %v1135 = vpack.c.b16 %v823, %v811
  %v1136 = vpack.c.b16 %v824, %v812
  %v1137 = vpack.c.b16 %v825, %v813
  %v1138 = vpack.c.b16 %v826, %v814
  %v1139 = vpack.c.b16 %v827, %v815
  %v1140 = vpack.c.b16 %v828, %v816
  %v1141 = vpack.c.b16 %v829, %v817
  %v1142 = vpack.c.b16 %v830, %v818
  %v1143 = vpack.c.b16 %v831, %v819
  %v1144 = vpack.c.b16 %v832, %v820
  %v1145 = vpack.c.b16 %v833, %v821
  %v1146 = vpack.c.b16 %v846, %v834
  %v1147 = vpack.c.b16 %v847, %v835
  %v1148 = vpack.c.b16 %v848, %v836
  %v1149 = vpack.c.b16 %v849, %v837
  %v1150 = vpack.c.b16 %v850, %v838
  %v1151 = vpack.c.b16 %v851, %v839
  %v1152 = vpack.c.b16 %v852, %v840
  %v1153 = vpack.c.b16 %v853, %v841
  %v1154 = vpack.c.b16 %v854, %v842
  %v1155 = vpack.c.b16 %v855, %v843
  %v1156 = vpack.c.b16 %v856, %v844
  %v1157 = vpack.c.b16 %v857, %v845
  %v1158 = vpack.c.b16 %v870, %v858
  %v1159 = vpack.c.b16 %v871, %v859
  %v1160 = vpack.c.b16 %v872, %v860
  %v1161 = vpack.c.b16 %v873, %v861
  %v1162 = vpack.c.b16 %v874, %v862
  %v1163 = vpack.c.b16 %v875, %v863
  %v1164 = vpack.c.b16 %v876, %v864
  %v1165 = vpack.c.b16 %v877, %v865
  %v1166 = vpack.c.b16 %v878, %v866
  %v1167 = vpack.c.b16 %v879, %v867
  %v1168 = vpack.c.b16 %v880, %v868
  %v1169 = vpack.c.b16 %v881, %v869
  %v1170 = vpack.c.b16 %v894, %v882
  %v1171 = vpack.c.b16 %v895, %v883
  %v1172 = vpack.c.b16 %v896, %v884
  %v1173 = vpack.c.b16 %v897, %v885
  %v1174 = vpack.c.b16 %v898, %v886
  %v1175 = vpack.c.b16 %v899, %v887
  %v1176 = vpack.c.b16 %v900, %v888
  %v1177 = vpack.c.b16 %v901, %v889
  %v1178 = vpack.c.b16 %v902, %v890
  %v1179 = vpack.c.b16 %v903, %v891
  %v1180 = vpack.c.b16 %v904, %v892
  %v1181 = vpack.c.b16 %v905, %v893
  %v1182 = vpack.c.b16 %v918, %v906
  %v1183 = vpack.c.b16 %v919, %v907
  %v1184 = vpack.c.b16 %v920, %v908
  %v1185 = vpack.c.b16 %v921, %v909
  %v1186 = vpack.c.b16 %v922, %v910
  %v1187 = vpack.c.b16 %v923, %v911
  %v1188 = vpack.c.b16 %v924, %v912
  %v1189 = vpack.c.b16 %v925, %v913
  %v1190 = vpack.c.b16 %v926, %v914
  %v1191 = vpack.c.b16 %v927, %v915
  %v1192 = vpack.c.b16 %v928, %v916
  %v1193 = vpack.c.b16 %v929, %v917
  %v1194 = vpack.c.b16 %v942, %v930
  %v1195 = vpack.c.b16 %v943, %v931
  %v1196 = vpack.c.b16 %v944, %v932
  %v1197 = vpack.c.b16 %v945, %v933
  %v1198 = vpack.c.b16 %v946, %v934
  %v1199 = vpack.c.b16 %v947, %v935
  %v1200 = vpack.c.b16 %v948, %v936
  %v1201 = vpack.c.b16 %v949, %v937
  %v1202 = vpack.c.b16 %v950, %v938
  %v1203 = vpack.c.b16 %v951, %v939
  %v1204 = vpack.c.b16 %v952, %v940
  %v1205 = vpack.c.b16 %v953, %v941
  %v1206 = vpack.c.b16 %v966, %v954
  %v1207 = vpack.c.b16 %v967, %v955
  %v1208 = vpack.c.b16 %v968, %v956
  %v1209 = vpack.c.b16 %v969, %v957
  %v1210 = vpack.c.b16 %v970, %v958
  %v1211 = vpack.c.b16 %v971, %v959
  %v1212 = vpack.c.b16 %v972, %v960
  %v1213 = vpack.c.b16 %v973, %v961
  %v1214 = vpack.c.b16 %v974, %v962
  %v1215 = vpack.c.b16 %v975, %v963
  %v1216 = vpack.c.b16 %v976, %v964
  %v1217 = vpack.c.b16 %v977, %v965
  %v1218 = vpack.c.b16 %v990, %v978
  %v1219 = vpack.c.b16 %v991, %v979
  %v1220 = vpack.c.b16 %v992, %v980
  %v1221 = vpack.c.b16 %v993, %v981
  %v1222 = vpack.c.b16 %v994, %v982
  %v1223 = vpack.c.b16 %v995, %v983
  %v1224 = vpack.c.b16 %v996, %v984
  %v1225 = vpack.c.b16 %v997, %v985
  %v1226 = vpack.c.b16 %v998, %v986
  %v1227 = vpack.c.b16 %v999, %v987
  %v1228 = vpack.c.b16 %v1000, %v988
  %v1229 = vpack.c.b16 %v1001, %v989
  %v1230 = vpack.c.b16 %v1014, %v1002
  %v1231 = vpack.c.b16 %v1015, %v1003
  %v1232 = vpack.c.b16 %v1016, %v1004
  %v1233 = vpack.c.b16 %v1017, %v1005
  %v1234 = vpack.c.b16 %v1018, %v1006
  %v1235 = vpack.c.b16 %v1019, %v1007
  %v1236 = vpack.c.b16 %v1020, %v1008
  %v1237 = vpack.c.b16 %v1021, %v1009
  %v1238 = vpack.c.b16 %v1022, %v1010
  %v1239 = vpack.c.b16 %v1023, %v1011
  %v1240 = vpack.c.b16 %v1024, %v1012
  %v1241 = vpack.c.b16 %v1025, %v1013
  %v1242 = vpack.c.b16 %v1038, %v1026
  %v1243 = vpack.c.b16 %v1039, %v1027
  %v1244 = vpack.c.b16 %v1040, %v1028
  %v1245 = vpack.c.b16 %v1041, %v1029
  %v1246 = vpack.c.b16 %v1042, %v1030
  %v1247 = vpack.c.b16 %v1043, %v1031
  %v1248 = vpack.c.b16 %v1044, %v1032
  %v1249 = vpack.c.b16 %v1045, %v1033
  %v1250 = vpack.c.b16 %v1046, %v1034
  %v1251 = vpack.c.b16 %v1047, %v1035
  %v1252 = vpack.c.b16 %v1048, %v1036
  %v1253 = vpack.c.b16 %v1049, %v1037
  %v1254 = vpack.c.b16 %v1062, %v1050
  %v1255 = vpack.c.b16 %v1063, %v1051
  %v1256 = vpack.c.b16 %v1064, %v1052
  %v1257 = vpack.c.b16 %v1065, %v1053
  %v1258 = vpack.c.b16 %v1066, %v1054
  %v1259 = vpack.c.b16 %v1067, %v1055
  %v1260 = vpack.c.b16 %v1068, %v1056
  %v1261 = vpack.c.b16 %v1069, %v1057
  %v1262 = vpack.c.b16 %v1070, %v1058
  %v1263 = vpack.c.b16 %v1071, %v1059
  %v1264 = vpack.c.b16 %v1072, %v1060
  %v1265 = vpack.c.b16 %v1073, %v1061
  %1458 = vmatprep.subr.bf16.mxu0 0
  %1459 = vmatpush1.bf16.msra.mxu0 %v210
  %1460 = vmatprep.subr.bf16.mxu0 0
  %1461 = vmatpush1.bf16.msra.mxu0 %v211
  %1462 = vmatprep.subr.bf16.mxu0 0
  %1463 = vmatpush1.bf16.msra.mxu0 %v212
  %1464 = vmatprep.subr.bf16.mxu0 0
  %1465 = vmatpush1.bf16.msra.mxu0 %v213
  %1466 = vmatprep.subr.bf16.mxu0 0
  %1467 = vmatpush1.bf16.msra.mxu0 %v214
  %1468 = vmatprep.subr.bf16.mxu0 0
  %1469 = vmatpush1.bf16.msra.mxu0 %v215
  %1470 = vmatprep.subr.bf16.mxu0 0
  %1471 = vmatpush1.bf16.msra.mxu0 %v216
  %1472 = vmatprep.subr.bf16.mxu0 0
  %1473 = vmatpush1.bf16.msra.mxu0 %v217
  %1474 = vmatprep.subr.bf16.mxu0 0
  %1475 = vmatpush1.bf16.msra.mxu0 %v218
  %1476 = vmatprep.subr.bf16.mxu0 0
  %1477 = vmatpush1.bf16.msra.mxu0 %v219
  %1478 = vmatprep.subr.bf16.mxu0 0
  %1479 = vmatpush1.bf16.msra.mxu0 %v220
  %1480 = vmatprep.subr.bf16.mxu0 0
  %1481 = vmatpush1.bf16.msra.mxu0 %v221
  %1482 = vmatprep.subr.bf16.mxu0 0
  %1483 = vmatpush1.bf16.msra.mxu0 %v222
  %1484 = vmatprep.subr.bf16.mxu0 0
  %1485 = vmatpush1.bf16.msra.mxu0 %v223
  %1486 = vmatprep.subr.bf16.mxu0 0
  %1487 = vmatpush1.bf16.msra.mxu0 %v224
  %1488 = vmatprep.subr.bf16.mxu0 0
  %1489 = vmatpush1.bf16.msra.mxu0 %v225
  %1490 = vmatprep.mubr.bf16.mxu0 %v1075
  %1491 = vmatmul.mubr.bf16.gmra.mrb[0].mxu0 %v1074
  %v1492 = vpop.f32.mrb[0].mxu0
  %v1493 = vadd.f32 0.0, %v1492
  %v1494 = vpop.f32.mrb[0].mxu0
  %v1495 = vpop.f32.mrb[0].mxu0
  %v1496 = vadd.f32 0.0, %v1495
  %v1497 = vpop.f32.mrb[0].mxu0
  %1498 = vmatprep.mubr.bf16.mxu0 %v1087
  %1499 = vmatmul.mubr.bf16.gmra.mrb[0].mxu0 %v1086
  %v1500 = vpop.f32.mrb[0].mxu0
  %v1501 = vadd.f32 0.0, %v1500
  %v1502 = vpop.f32.mrb[0].mxu0
  %v1503 = vpop.f32.mrb[0].mxu0
  %v1504 = vadd.f32 0.0, %v1503
  %v1505 = vpop.f32.mrb[0].mxu0
  %1506 = vmatprep.mubr.bf16.mxu0 %v1099
  %1507 = vmatmul.mubr.bf16.gmra.mrb[0].mxu0 %v1098
  %v1508 = vpop.f32.mrb[0].mxu0
  %v1509 = vadd.f32 0.0, %v1508
  %v1510 = vpop.f32.mrb[0].mxu0
  %v1511 = vpop.f32.mrb[0].mxu0
  %v1512 = vadd.f32 0.0, %v1511
  %v1513 = vpop.f32.mrb[0].mxu0
  %1514 = vmatprep.mubr.bf16.mxu0 %v1111
  %1515 = vmatmul.mubr.bf16.gmra.mrb[0].mxu0 %v1110
  %v1516 = vpop.f32.mrb[0].mxu0
  %v1517 = vadd.f32 0.0, %v1516
  %v1518 = vpop.f32.mrb[0].mxu0
  %v1519 = vpop.f32.mrb[0].mxu0
  %v1520 = vadd.f32 0.0, %v1519
  %v1521 = vpop.f32.mrb[0].mxu0
  %1522 = vmatprep.mubr.bf16.mxu0 %v1123
  %1523 = vmatmul.mubr.bf16.gmra.mrb[0].mxu0 %v1122
  %v1524 = vpop.f32.mrb[0].mxu0
  %v1525 = vadd.f32 0.0, %v1524
  %v1526 = vpop.f32.mrb[0].mxu0
  %v1527 = vpop.f32.mrb[0].mxu0
  %v1528 = vadd.f32 0.0, %v1527
  %v1529 = vpop.f32.mrb[0].mxu0
  %1530 = vmatprep.mubr.bf16.mxu0 %v1135
  %1531 = vmatmul.mubr.bf16.gmra.mrb[0].mxu0 %v1134
  %v1532 = vpop.f32.mrb[0].mxu0
  %v1533 = vadd.f32 0.0, %v1532
  %v1534 = vpop.f32.mrb[0].mxu0
  %v1535 = vpop.f32.mrb[0].mxu0
  %v1536 = vadd.f32 0.0, %v1535
  %v1537 = vpop.f32.mrb[0].mxu0
  %1538 = vmatprep.mubr.bf16.mxu0 %v1147
  %1539 = vmatmul.mubr.bf16.gmra.mrb[0].mxu0 %v1146
  %v1540 = vpop.f32.mrb[0].mxu0
  %v1541 = vadd.f32 0.0, %v1540
  %v1542 = vpop.f32.mrb[0].mxu0
  %v1543 = vpop.f32.mrb[0].mxu0
  %v1544 = vadd.f32 0.0, %v1543
  %v1545 = vpop.f32.mrb[0].mxu0
  %1546 = vmatprep.mubr.bf16.mxu0 %v1159
  %1547 = vmatmul.mubr.bf16.gmra.mrb[0].mxu0 %v1158
  %v1548 = vpop.f32.mrb[0].mxu0
  %v1549 = vadd.f32 0.0, %v1548
  %v1550 = vpop.f32.mrb[0].mxu0
  %v1551 = vpop.f32.mrb[0].mxu0
  %v1552 = vadd.f32 0.0, %v1551
  %v1553 = vpop.f32.mrb[0].mxu0
  %1554 = vmatprep.mubr.bf16.mxu0 %v1171
  %1555 = vmatmul.mubr.bf16.gmra.mrb[0].mxu0 %v1170
  %v1556 = vpop.f32.mrb[0].mxu0
  %v1557 = vadd.f32 0.0, %v1556
  %v1558 = vpop.f32.mrb[0].mxu0
  %v1559 = vpop.f32.mrb[0].mxu0
  %v1560 = vadd.f32 0.0, %v1559
  %v1561 = vpop.f32.mrb[0].mxu0
  %1562 = vmatprep.mubr.bf16.mxu0 %v1183
  %1563 = vmatmul.mubr.bf16.gmra.mrb[0].mxu0 %v1182
  %v1564 = vpop.f32.mrb[0].mxu0
  %v1565 = vadd.f32 0.0, %v1564
  %v1566 = vpop.f32.mrb[0].mxu0
  %v1567 = vpop.f32.mrb[0].mxu0
  %v1568 = vadd.f32 0.0, %v1567
  %v1569 = vpop.f32.mrb[0].mxu0
  %1570 = vmatprep.mubr.bf16.mxu0 %v1195
  %1571 = vmatmul.mubr.bf16.gmra.mrb[0].mxu0 %v1194
  %v1572 = vpop.f32.mrb[0].mxu0
  %v1573 = vadd.f32 0.0, %v1572
  %v1574 = vpop.f32.mrb[0].mxu0
  %v1575 = vpop.f32.mrb[0].mxu0
  %v1576 = vadd.f32 0.0, %v1575
  %v1577 = vpop.f32.mrb[0].mxu0
  %1578 = vmatprep.mubr.bf16.mxu0 %v1207
  %1579 = vmatmul.mubr.bf16.gmra.mrb[0].mxu0 %v1206
  %v1580 = vpop.f32.mrb[0].mxu0
  %v1581 = vadd.f32 0.0, %v1580
  %v1582 = vpop.f32.mrb[0].mxu0
  %v1583 = vpop.f32.mrb[0].mxu0
  %v1584 = vadd.f32 0.0, %v1583
  %v1585 = vpop.f32.mrb[0].mxu0
  %1586 = vmatprep.mubr.bf16.mxu0 %v1219
  %1587 = vmatmul.mubr.bf16.gmra.mrb[0].mxu0 %v1218
  %v1588 = vpop.f32.mrb[0].mxu0
  %v1589 = vadd.f32 0.0, %v1588
  %v1590 = vpop.f32.mrb[0].mxu0
  %v1591 = vpop.f32.mrb[0].mxu0
  %v1592 = vadd.f32 0.0, %v1591
  %v1593 = vpop.f32.mrb[0].mxu0
  %1594 = vmatprep.mubr.bf16.mxu0 %v1231
  %1595 = vmatmul.mubr.bf16.gmra.mrb[0].mxu0 %v1230
  %v1596 = vpop.f32.mrb[0].mxu0
  %v1597 = vadd.f32 0.0, %v1596
  %v1598 = vpop.f32.mrb[0].mxu0
  %v1599 = vpop.f32.mrb[0].mxu0
  %v1600 = vadd.f32 0.0, %v1599
  %v1601 = vpop.f32.mrb[0].mxu0
  %1602 = vmatprep.mubr.bf16.mxu0 %v1243
  %1603 = vmatmul.mubr.bf16.gmra.mrb[0].mxu0 %v1242
  %v1604 = vpop.f32.mrb[0].mxu0
  %v1605 = vadd.f32 0.0, %v1604
  %v1606 = vpop.f32.mrb[0].mxu0
  %v1607 = vpop.f32.mrb[0].mxu0
  %v1608 = vadd.f32 0.0, %v1607
  %v1609 = vpop.f32.mrb[0].mxu0
  %1610 = vmatprep.mubr.bf16.mxu0 %v1255
  %1611 = vmatmul.mubr.bf16.gmra.mrb[0].mxu0 %v1254
  %v1612 = vpop.f32.mrb[0].mxu0
  %v1613 = vadd.f32 0.0, %v1612
  %v1614 = vpop.f32.mrb[0].mxu0
  %v1615 = vpop.f32.mrb[0].mxu0
  %v1616 = vadd.f32 0.0, %v1615
  %v1617 = vpop.f32.mrb[0].mxu0
  %1618 = vdwg.mxu0
  %1619 = vmatprep.subr.bf16.mxu0 0
  %1620 = vmatpush1.bf16.msra.mxu0 %v226
  %1621 = vmatprep.subr.bf16.mxu0 0
  %1622 = vmatpush1.bf16.msra.mxu0 %v227
  %1623 = vmatprep.subr.bf16.mxu0 0
  %1624 = vmatpush1.bf16.msra.mxu0 %v228
  %1625 = vmatprep.subr.bf16.mxu0 0
  %1626 = vmatpush1.bf16.msra.mxu0 %v229
  %1627 = vmatprep.subr.bf16.mxu0 0
  %1628 = vmatpush1.bf16.msra.mxu0 %v230
  %1629 = vmatprep.subr.bf16.mxu0 0
  %1630 = vmatpush1.bf16.msra.mxu0 %v231
  %1631 = vmatprep.subr.bf16.mxu0 0
  %1632 = vmatpush1.bf16.msra.mxu0 %v232
  %1633 = vmatprep.subr.bf16.mxu0 0
  %1634 = vmatpush1.bf16.msra.mxu0 %v233
  %1635 = vmatprep.subr.bf16.mxu0 0
  %1636 = vmatpush1.bf16.msra.mxu0 %v234
  %1637 = vmatprep.subr.bf16.mxu0 0
  %1638 = vmatpush1.bf16.msra.mxu0 %v235
  %1639 = vmatprep.subr.bf16.mxu0 0
  %1640 = vmatpush1.bf16.msra.mxu0 %v236
  %1641 = vmatprep.subr.bf16.mxu0 0
  %1642 = vmatpush1.bf16.msra.mxu0 %v237
  %1643 = vmatprep.subr.bf16.mxu0 0
  %1644 = vmatpush1.bf16.msra.mxu0 %v238
  %1645 = vmatprep.subr.bf16.mxu0 0
  %1646 = vmatpush1.bf16.msra.mxu0 %v239
  %1647 = vmatprep.subr.bf16.mxu0 0
  %1648 = vmatpush1.bf16.msra.mxu0 %v240
  %1649 = vmatprep.subr.bf16.mxu0 0
  %1650 = vmatpush1.bf16.msra.mxu0 %v241
  %1651 = vmatprep.mubr.bf16.mxu0 %v1077
  %1652 = vmatmul.mubr.bf16.gmra.mrb[0].mxu0 %v1076
  %v1653 = vpop.f32.mrb[0].mxu0
  %v1654 = vadd.f32 %v1493, %v1653
  %v1655 = vpop.f32.mrb[0].mxu0
  %v1656 = vpop.f32.mrb[0].mxu0
  %v1657 = vadd.f32 %v1496, %v1656
  %v1658 = vpop.f32.mrb[0].mxu0
  %1659 = vmatprep.mubr.bf16.mxu0 %v1089
  %1660 = vmatmul.mubr.bf16.gmra.mrb[0].mxu0 %v1088
  %v1661 = vpop.f32.mrb[0].mxu0
  %v1662 = vadd.f32 %v1501, %v1661
  %v1663 = vpop.f32.mrb[0].mxu0
  %v1664 = vpop.f32.mrb[0].mxu0
  %v1665 = vadd.f32 %v1504, %v1664
  %v1666 = vpop.f32.mrb[0].mxu0
  %1667 = vmatprep.mubr.bf16.mxu0 %v1101
  %1668 = vmatmul.mubr.bf16.gmra.mrb[0].mxu0 %v1100
  %v1669 = vpop.f32.mrb[0].mxu0
  %v1670 = vadd.f32 %v1509, %v1669
  %v1671 = vpop.f32.mrb[0].mxu0
  %v1672 = vpop.f32.mrb[0].mxu0
  %v1673 = vadd.f32 %v1512, %v1672
  %v1674 = vpop.f32.mrb[0].mxu0
  %1675 = vmatprep.mubr.bf16.mxu0 %v1113
  %1676 = vmatmul.mubr.bf16.gmra.mrb[0].mxu0 %v1112
  %v1677 = vpop.f32.mrb[0].mxu0
  %v1678 = vadd.f32 %v1517, %v1677
  %v1679 = vpop.f32.mrb[0].mxu0
  %v1680 = vpop.f32.mrb[0].mxu0
  %v1681 = vadd.f32 %v1520, %v1680
  %v1682 = vpop.f32.mrb[0].mxu0
  %1683 = vmatprep.mubr.bf16.mxu0 %v1125
  %1684 = vmatmul.mubr.bf16.gmra.mrb[0].mxu0 %v1124
  %v1685 = vpop.f32.mrb[0].mxu0
  %v1686 = vadd.f32 %v1525, %v1685
  %v1687 = vpop.f32.mrb[0].mxu0
  %v1688 = vpop.f32.mrb[0].mxu0
  %v1689 = vadd.f32 %v1528, %v1688
  %v1690 = vpop.f32.mrb[0].mxu0
  %1691 = vmatprep.mubr.bf16.mxu0 %v1137
  %1692 = vmatmul.mubr.bf16.gmra.mrb[0].mxu0 %v1136
  %v1693 = vpop.f32.mrb[0].mxu0
  %v1694 = vadd.f32 %v1533, %v1693
  %v1695 = vpop.f32.mrb[0].mxu0
  %v1696 = vpop.f32.mrb[0].mxu0
  %v1697 = vadd.f32 %v1536, %v1696
  %v1698 = vpop.f32.mrb[0].mxu0
  %1699 = vmatprep.mubr.bf16.mxu0 %v1149
  %1700 = vmatmul.mubr.bf16.gmra.mrb[0].mxu0 %v1148
  %v1701 = vpop.f32.mrb[0].mxu0
  %v1702 = vadd.f32 %v1541, %v1701
  %v1703 = vpop.f32.mrb[0].mxu0
  %v1704 = vpop.f32.mrb[0].mxu0
  %v1705 = vadd.f32 %v1544, %v1704
  %v1706 = vpop.f32.mrb[0].mxu0
  %1707 = vmatprep.mubr.bf16.mxu0 %v1161
  %1708 = vmatmul.mubr.bf16.gmra.mrb[0].mxu0 %v1160
  %v1709 = vpop.f32.mrb[0].mxu0
  %v1710 = vadd.f32 %v1549, %v1709
  %v1711 = vpop.f32.mrb[0].mxu0
  %v1712 = vpop.f32.mrb[0].mxu0
  %v1713 = vadd.f32 %v1552, %v1712
  %v1714 = vpop.f32.mrb[0].mxu0
  %1715 = vmatprep.mubr.bf16.mxu0 %v1173
  %1716 = vmatmul.mubr.bf16.gmra.mrb[0].mxu0 %v1172
  %v1717 = vpop.f32.mrb[0].mxu0
  %v1718 = vadd.f32 %v1557, %v1717
  %v1719 = vpop.f32.mrb[0].mxu0
  %v1720 = vpop.f32.mrb[0].mxu0
  %v1721 = vadd.f32 %v1560, %v1720
  %v1722 = vpop.f32.mrb[0].mxu0
  %1723 = vmatprep.mubr.bf16.mxu0 %v1185
  %1724 = vmatmul.mubr.bf16.gmra.mrb[0].mxu0 %v1184
  %v1725 = vpop.f32.mrb[0].mxu0
  %v1726 = vadd.f32 %v1565, %v1725
  %v1727 = vpop.f32.mrb[0].mxu0
  %v1728 = vpop.f32.mrb[0].mxu0
  %v1729 = vadd.f32 %v1568, %v1728
  %v1730 = vpop.f32.mrb[0].mxu0
  %1731 = vmatprep.mubr.bf16.mxu0 %v1197
  %1732 = vmatmul.mubr.bf16.gmra.mrb[0].mxu0 %v1196
  %v1733 = vpop.f32.mrb[0].mxu0
  %v1734 = vadd.f32 %v1573, %v1733
  %v1735 = vpop.f32.mrb[0].mxu0
  %v1736 = vpop.f32.mrb[0].mxu0
  %v1737 = vadd.f32 %v1576, %v1736
  %v1738 = vpop.f32.mrb[0].mxu0
  %1739 = vmatprep.mubr.bf16.mxu0 %v1209
  %1740 = vmatmul.mubr.bf16.gmra.mrb[0].mxu0 %v1208
  %v1741 = vpop.f32.mrb[0].mxu0
  %v1742 = vadd.f32 %v1581, %v1741
  %v1743 = vpop.f32.mrb[0].mxu0
  %v1744 = vpop.f32.mrb[0].mxu0
  %v1745 = vadd.f32 %v1584, %v1744
  %v1746 = vpop.f32.mrb[0].mxu0
  %1747 = vmatprep.mubr.bf16.mxu0 %v1221
  %1748 = vmatmul.mubr.bf16.gmra.mrb[0].mxu0 %v1220
  %v1749 = vpop.f32.mrb[0].mxu0
  %v1750 = vadd.f32 %v1589, %v1749
  %v1751 = vpop.f32.mrb[0].mxu0
  %v1752 = vpop.f32.mrb[0].mxu0
  %v1753 = vadd.f32 %v1592, %v1752
  %v1754 = vpop.f32.mrb[0].mxu0
  %1755 = vmatprep.mubr.bf16.mxu0 %v1233
  %1756 = vmatmul.mubr.bf16.gmra.mrb[0].mxu0 %v1232
  %v1757 = vpop.f32.mrb[0].mxu0
  %v1758 = vadd.f32 %v1597, %v1757
  %v1759 = vpop.f32.mrb[0].mxu0
  %v1760 = vpop.f32.mrb[0].mxu0
  %v1761 = vadd.f32 %v1600, %v1760
  %v1762 = vpop.f32.mrb[0].mxu0
  %1763 = vmatprep.mubr.bf16.mxu0 %v1245
  %1764 = vmatmul.mubr.bf16.gmra.mrb[0].mxu0 %v1244
  %v1765 = vpop.f32.mrb[0].mxu0
  %v1766 = vadd.f32 %v1605, %v1765
  %v1767 = vpop.f32.mrb[0].mxu0
  %v1768 = vpop.f32.mrb[0].mxu0
  %v1769 = vadd.f32 %v1608, %v1768
  %v1770 = vpop.f32.mrb[0].mxu0
  %1771 = vmatprep.mubr.bf16.mxu0 %v1257
  %1772 = vmatmul.mubr.bf16.gmra.mrb[0].mxu0 %v1256
  %v1773 = vpop.f32.mrb[0].mxu0
  %v1774 = vadd.f32 %v1613, %v1773
  %v1775 = vpop.f32.mrb[0].mxu0
  %v1776 = vpop.f32.mrb[0].mxu0
  %v1777 = vadd.f32 %v1616, %v1776
  %v1778 = vpop.f32.mrb[0].mxu0
  %1779 = vdwg.mxu0
  %1780 = vmatprep.subr.bf16.mxu0 0
  %1781 = vmatpush1.bf16.msra.mxu0 %v242
  %1782 = vmatprep.subr.bf16.mxu0 0
  %1783 = vmatpush1.bf16.msra.mxu0 %v243
  %1784 = vmatprep.subr.bf16.mxu0 0
  %1785 = vmatpush1.bf16.msra.mxu0 %v244
  %1786 = vmatprep.subr.bf16.mxu0 0
  %1787 = vmatpush1.bf16.msra.mxu0 %v245
  %1788 = vmatprep.subr.bf16.mxu0 0
  %1789 = vmatpush1.bf16.msra.mxu0 %v246
  %1790 = vmatprep.subr.bf16.mxu0 0
  %1791 = vmatpush1.bf16.msra.mxu0 %v247
  %1792 = vmatprep.subr.bf16.mxu0 0
  %1793 = vmatpush1.bf16.msra.mxu0 %v248
  %1794 = vmatprep.subr.bf16.mxu0 0
  %1795 = vmatpush1.bf16.msra.mxu0 %v249
  %1796 = vmatprep.subr.bf16.mxu0 0
  %1797 = vmatpush1.bf16.msra.mxu0 %v250
  %1798 = vmatprep.subr.bf16.mxu0 0
  %1799 = vmatpush1.bf16.msra.mxu0 %v251
  %1800 = vmatprep.subr.bf16.mxu0 0
  %1801 = vmatpush1.bf16.msra.mxu0 %v252
  %1802 = vmatprep.subr.bf16.mxu0 0
  %1803 = vmatpush1.bf16.msra.mxu0 %v253
  %1804 = vmatprep.subr.bf16.mxu0 0
  %1805 = vmatpush1.bf16.msra.mxu0 %v254
  %1806 = vmatprep.subr.bf16.mxu0 0
  %1807 = vmatpush1.bf16.msra.mxu0 %v255
  %1808 = vmatprep.subr.bf16.mxu0 0
  %1809 = vmatpush1.bf16.msra.mxu0 %v256
  %1810 = vmatprep.subr.bf16.mxu0 0
  %1811 = vmatpush1.bf16.msra.mxu0 %v257
  %1812 = vmatprep.mubr.bf16.mxu0 %v1079
  %1813 = vmatmul.mubr.bf16.gmra.mrb[0].mxu0 %v1078
  %v1814 = vpop.f32.mrb[0].mxu0
  %v1815 = vadd.f32 %v1654, %v1814
  %v1816 = vpop.f32.mrb[0].mxu0
  %v1817 = vpop.f32.mrb[0].mxu0
  %v1818 = vadd.f32 %v1657, %v1817
  %v1819 = vpop.f32.mrb[0].mxu0
  %1820 = vmatprep.mubr.bf16.mxu0 %v1091
  %1821 = vmatmul.mubr.bf16.gmra.mrb[0].mxu0 %v1090
  %v1822 = vpop.f32.mrb[0].mxu0
  %v1823 = vadd.f32 %v1662, %v1822
  %v1824 = vpop.f32.mrb[0].mxu0
  %v1825 = vpop.f32.mrb[0].mxu0
  %v1826 = vadd.f32 %v1665, %v1825
  %v1827 = vpop.f32.mrb[0].mxu0
  %1828 = vmatprep.mubr.bf16.mxu0 %v1103
  %1829 = vmatmul.mubr.bf16.gmra.mrb[0].mxu0 %v1102
  %v1830 = vpop.f32.mrb[0].mxu0
  %v1831 = vadd.f32 %v1670, %v1830
  %v1832 = vpop.f32.mrb[0].mxu0
  %v1833 = vpop.f32.mrb[0].mxu0
  %v1834 = vadd.f32 %v1673, %v1833
  %v1835 = vpop.f32.mrb[0].mxu0
  %1836 = vmatprep.mubr.bf16.mxu0 %v1115
  %1837 = vmatmul.mubr.bf16.gmra.mrb[0].mxu0 %v1114
  %v1838 = vpop.f32.mrb[0].mxu0
  %v1839 = vadd.f32 %v1678, %v1838
  %v1840 = vpop.f32.mrb[0].mxu0
  %v1841 = vpop.f32.mrb[0].mxu0
  %v1842 = vadd.f32 %v1681, %v1841
  %v1843 = vpop.f32.mrb[0].mxu0
  %1844 = vmatprep.mubr.bf16.mxu0 %v1127
  %1845 = vmatmul.mubr.bf16.gmra.mrb[0].mxu0 %v1126
  %v1846 = vpop.f32.mrb[0].mxu0
  %v1847 = vadd.f32 %v1686, %v1846
  %v1848 = vpop.f32.mrb[0].mxu0
  %v1849 = vpop.f32.mrb[0].mxu0
  %v1850 = vadd.f32 %v1689, %v1849
  %v1851 = vpop.f32.mrb[0].mxu0
  %1852 = vmatprep.mubr.bf16.mxu0 %v1139
  %1853 = vmatmul.mubr.bf16.gmra.mrb[0].mxu0 %v1138
  %v1854 = vpop.f32.mrb[0].mxu0
  %v1855 = vadd.f32 %v1694, %v1854
  %v1856 = vpop.f32.mrb[0].mxu0
  %v1857 = vpop.f32.mrb[0].mxu0
  %v1858 = vadd.f32 %v1697, %v1857
  %v1859 = vpop.f32.mrb[0].mxu0
  %1860 = vmatprep.mubr.bf16.mxu0 %v1151
  %1861 = vmatmul.mubr.bf16.gmra.mrb[0].mxu0 %v1150
  %v1862 = vpop.f32.mrb[0].mxu0
  %v1863 = vadd.f32 %v1702, %v1862
  %v1864 = vpop.f32.mrb[0].mxu0
  %v1865 = vpop.f32.mrb[0].mxu0
  %v1866 = vadd.f32 %v1705, %v1865
  %v1867 = vpop.f32.mrb[0].mxu0
  %1868 = vmatprep.mubr.bf16.mxu0 %v1163
  %1869 = vmatmul.mubr.bf16.gmra.mrb[0].mxu0 %v1162
  %v1870 = vpop.f32.mrb[0].mxu0
  %v1871 = vadd.f32 %v1710, %v1870
  %v1872 = vpop.f32.mrb[0].mxu0
  %v1873 = vpop.f32.mrb[0].mxu0
  %v1874 = vadd.f32 %v1713, %v1873
  %v1875 = vpop.f32.mrb[0].mxu0
  %1876 = vmatprep.mubr.bf16.mxu0 %v1175
  %1877 = vmatmul.mubr.bf16.gmra.mrb[0].mxu0 %v1174
  %v1878 = vpop.f32.mrb[0].mxu0
  %v1879 = vadd.f32 %v1718, %v1878
  %v1880 = vpop.f32.mrb[0].mxu0
  %v1881 = vpop.f32.mrb[0].mxu0
  %v1882 = vadd.f32 %v1721, %v1881
  %v1883 = vpop.f32.mrb[0].mxu0
  %1884 = vmatprep.mubr.bf16.mxu0 %v1187
  %1885 = vmatmul.mubr.bf16.gmra.mrb[0].mxu0 %v1186
  %v1886 = vpop.f32.mrb[0].mxu0
  %v1887 = vadd.f32 %v1726, %v1886
  %v1888 = vpop.f32.mrb[0].mxu0
  %v1889 = vpop.f32.mrb[0].mxu0
  %v1890 = vadd.f32 %v1729, %v1889
  %v1891 = vpop.f32.mrb[0].mxu0
  %1892 = vmatprep.mubr.bf16.mxu0 %v1199
  %1893 = vmatmul.mubr.bf16.gmra.mrb[0].mxu0 %v1198
  %v1894 = vpop.f32.mrb[0].mxu0
  %v1895 = vadd.f32 %v1734, %v1894
  %v1896 = vpop.f32.mrb[0].mxu0
  %v1897 = vpop.f32.mrb[0].mxu0
  %v1898 = vadd.f32 %v1737, %v1897
  %v1899 = vpop.f32.mrb[0].mxu0
  %1900 = vmatprep.mubr.bf16.mxu0 %v1211
  %1901 = vmatmul.mubr.bf16.gmra.mrb[0].mxu0 %v1210
  %v1902 = vpop.f32.mrb[0].mxu0
  %v1903 = vadd.f32 %v1742, %v1902
  %v1904 = vpop.f32.mrb[0].mxu0
  %v1905 = vpop.f32.mrb[0].mxu0
  %v1906 = vadd.f32 %v1745, %v1905
  %v1907 = vpop.f32.mrb[0].mxu0
  %1908 = vmatprep.mubr.bf16.mxu0 %v1223
  %1909 = vmatmul.mubr.bf16.gmra.mrb[0].mxu0 %v1222
  %v1910 = vpop.f32.mrb[0].mxu0
  %v1911 = vadd.f32 %v1750, %v1910
  %v1912 = vpop.f32.mrb[0].mxu0
  %v1913 = vpop.f32.mrb[0].mxu0
  %v1914 = vadd.f32 %v1753, %v1913
  %v1915 = vpop.f32.mrb[0].mxu0
  %1916 = vmatprep.mubr.bf16.mxu0 %v1235
  %1917 = vmatmul.mubr.bf16.gmra.mrb[0].mxu0 %v1234
  %v1918 = vpop.f32.mrb[0].mxu0
  %v1919 = vadd.f32 %v1758, %v1918
  %v1920 = vpop.f32.mrb[0].mxu0
  %v1921 = vpop.f32.mrb[0].mxu0
  %v1922 = vadd.f32 %v1761, %v1921
  %v1923 = vpop.f32.mrb[0].mxu0
  %1924 = vmatprep.mubr.bf16.mxu0 %v1247
  %1925 = vmatmul.mubr.bf16.gmra.mrb[0].mxu0 %v1246
  %v1926 = vpop.f32.mrb[0].mxu0
  %v1927 = vadd.f32 %v1766, %v1926
  %v1928 = vpop.f32.mrb[0].mxu0
  %v1929 = vpop.f32.mrb[0].mxu0
  %v1930 = vadd.f32 %v1769, %v1929
  %v1931 = vpop.f32.mrb[0].mxu0
  %1932 = vmatprep.mubr.bf16.mxu0 %v1259
  %1933 = vmatmul.mubr.bf16.gmra.mrb[0].mxu0 %v1258
  %v1934 = vpop.f32.mrb[0].mxu0
  %v1935 = vadd.f32 %v1774, %v1934
  %v1936 = vpop.f32.mrb[0].mxu0
  %v1937 = vpop.f32.mrb[0].mxu0
  %v1938 = vadd.f32 %v1777, %v1937
  %v1939 = vpop.f32.mrb[0].mxu0
  %1940 = vdwg.mxu0
  %1941 = vmatprep.subr.bf16.mxu0 0
  %1942 = vmatpush1.bf16.msra.mxu0 %v258
  %1943 = vmatprep.subr.bf16.mxu0 0
  %1944 = vmatpush1.bf16.msra.mxu0 %v259
  %1945 = vmatprep.subr.bf16.mxu0 0
  %1946 = vmatpush1.bf16.msra.mxu0 %v260
  %1947 = vmatprep.subr.bf16.mxu0 0
  %1948 = vmatpush1.bf16.msra.mxu0 %v261
  %1949 = vmatprep.subr.bf16.mxu0 0
  %1950 = vmatpush1.bf16.msra.mxu0 %v262
  %1951 = vmatprep.subr.bf16.mxu0 0
  %1952 = vmatpush1.bf16.msra.mxu0 %v263
  %1953 = vmatprep.subr.bf16.mxu0 0
  %1954 = vmatpush1.bf16.msra.mxu0 %v264
  %1955 = vmatprep.subr.bf16.mxu0 0
  %1956 = vmatpush1.bf16.msra.mxu0 %v265
  %1957 = vmatprep.subr.bf16.mxu0 0
  %1958 = vmatpush1.bf16.msra.mxu0 %v266
  %1959 = vmatprep.subr.bf16.mxu0 0
  %1960 = vmatpush1.bf16.msra.mxu0 %v267
  %1961 = vmatprep.subr.bf16.mxu0 0
  %1962 = vmatpush1.bf16.msra.mxu0 %v268
  %1963 = vmatprep.subr.bf16.mxu0 0
  %1964 = vmatpush1.bf16.msra.mxu0 %v269
  %1965 = vmatprep.subr.bf16.mxu0 0
  %1966 = vmatpush1.bf16.msra.mxu0 %v270
  %1967 = vmatprep.subr.bf16.mxu0 0
  %1968 = vmatpush1.bf16.msra.mxu0 %v271
  %1969 = vmatprep.subr.bf16.mxu0 0
  %1970 = vmatpush1.bf16.msra.mxu0 %v272
  %1971 = vmatprep.subr.bf16.mxu0 0
  %1972 = vmatpush1.bf16.msra.mxu0 %v273
  %1973 = vmatprep.mubr.bf16.mxu0 %v1081
  %1974 = vmatmul.mubr.bf16.gmra.mrb[0].mxu0 %v1080
  %v1975 = vpop.f32.mrb[0].mxu0
  %v1976 = vadd.f32 %v1815, %v1975
  %v1977 = vpop.f32.mrb[0].mxu0
  %v1978 = vpop.f32.mrb[0].mxu0
  %v1979 = vadd.f32 %v1818, %v1978
  %v1980 = vpop.f32.mrb[0].mxu0
  %1981 = vmatprep.mubr.bf16.mxu0 %v1093
  %1982 = vmatmul.mubr.bf16.gmra.mrb[0].mxu0 %v1092
  %v1983 = vpop.f32.mrb[0].mxu0
  %v1984 = vadd.f32 %v1823, %v1983
  %v1985 = vpop.f32.mrb[0].mxu0
  %v1986 = vpop.f32.mrb[0].mxu0
  %v1987 = vadd.f32 %v1826, %v1986
  %v1988 = vpop.f32.mrb[0].mxu0
  %1989 = vmatprep.mubr.bf16.mxu0 %v1105
  %1990 = vmatmul.mubr.bf16.gmra.mrb[0].mxu0 %v1104
  %v1991 = vpop.f32.mrb[0].mxu0
  %v1992 = vadd.f32 %v1831, %v1991
  %v1993 = vpop.f32.mrb[0].mxu0
  %v1994 = vpop.f32.mrb[0].mxu0
  %v1995 = vadd.f32 %v1834, %v1994
  %v1996 = vpop.f32.mrb[0].mxu0
  %1997 = vmatprep.mubr.bf16.mxu0 %v1117
  %1998 = vmatmul.mubr.bf16.gmra.mrb[0].mxu0 %v1116
  %v1999 = vpop.f32.mrb[0].mxu0
  %v2000 = vadd.f32 %v1839, %v1999
  %v2001 = vpop.f32.mrb[0].mxu0
  %v2002 = vpop.f32.mrb[0].mxu0
  %v2003 = vadd.f32 %v1842, %v2002
  %v2004 = vpop.f32.mrb[0].mxu0
  %2005 = vmatprep.mubr.bf16.mxu0 %v1129
  %2006 = vmatmul.mubr.bf16.gmra.mrb[0].mxu0 %v1128
  %v2007 = vpop.f32.mrb[0].mxu0
  %v2008 = vadd.f32 %v1847, %v2007
  %v2009 = vpop.f32.mrb[0].mxu0
  %v2010 = vpop.f32.mrb[0].mxu0
  %v2011 = vadd.f32 %v1850, %v2010
  %v2012 = vpop.f32.mrb[0].mxu0
  %2013 = vmatprep.mubr.bf16.mxu0 %v1141
  %2014 = vmatmul.mubr.bf16.gmra.mrb[0].mxu0 %v1140
  %v2015 = vpop.f32.mrb[0].mxu0
  %v2016 = vadd.f32 %v1855, %v2015
  %v2017 = vpop.f32.mrb[0].mxu0
  %v2018 = vpop.f32.mrb[0].mxu0
  %v2019 = vadd.f32 %v1858, %v2018
  %v2020 = vpop.f32.mrb[0].mxu0
  %2021 = vmatprep.mubr.bf16.mxu0 %v1153
  %2022 = vmatmul.mubr.bf16.gmra.mrb[0].mxu0 %v1152
  %v2023 = vpop.f32.mrb[0].mxu0
  %v2024 = vadd.f32 %v1863, %v2023
  %v2025 = vpop.f32.mrb[0].mxu0
  %v2026 = vpop.f32.mrb[0].mxu0
  %v2027 = vadd.f32 %v1866, %v2026
  %v2028 = vpop.f32.mrb[0].mxu0
  %2029 = vmatprep.mubr.bf16.mxu0 %v1165
  %2030 = vmatmul.mubr.bf16.gmra.mrb[0].mxu0 %v1164
  %v2031 = vpop.f32.mrb[0].mxu0
  %v2032 = vadd.f32 %v1871, %v2031
  %v2033 = vpop.f32.mrb[0].mxu0
  %v2034 = vpop.f32.mrb[0].mxu0
  %v2035 = vadd.f32 %v1874, %v2034
  %v2036 = vpop.f32.mrb[0].mxu0
  %2037 = vmatprep.mubr.bf16.mxu0 %v1177
  %2038 = vmatmul.mubr.bf16.gmra.mrb[0].mxu0 %v1176
  %v2039 = vpop.f32.mrb[0].mxu0
  %v2040 = vadd.f32 %v1879, %v2039
  %v2041 = vpop.f32.mrb[0].mxu0
  %v2042 = vpop.f32.mrb[0].mxu0
  %v2043 = vadd.f32 %v1882, %v2042
  %v2044 = vpop.f32.mrb[0].mxu0
  %2045 = vmatprep.mubr.bf16.mxu0 %v1189
  %2046 = vmatmul.mubr.bf16.gmra.mrb[0].mxu0 %v1188
  %v2047 = vpop.f32.mrb[0].mxu0
  %v2048 = vadd.f32 %v1887, %v2047
  %v2049 = vpop.f32.mrb[0].mxu0
  %v2050 = vpop.f32.mrb[0].mxu0
  %v2051 = vadd.f32 %v1890, %v2050
  %v2052 = vpop.f32.mrb[0].mxu0
  %2053 = vmatprep.mubr.bf16.mxu0 %v1201
  %2054 = vmatmul.mubr.bf16.gmra.mrb[0].mxu0 %v1200
  %v2055 = vpop.f32.mrb[0].mxu0
  %v2056 = vadd.f32 %v1895, %v2055
  %v2057 = vpop.f32.mrb[0].mxu0
  %v2058 = vpop.f32.mrb[0].mxu0
  %v2059 = vadd.f32 %v1898, %v2058
  %v2060 = vpop.f32.mrb[0].mxu0
  %2061 = vmatprep.mubr.bf16.mxu0 %v1213
  %2062 = vmatmul.mubr.bf16.gmra.mrb[0].mxu0 %v1212
  %v2063 = vpop.f32.mrb[0].mxu0
  %v2064 = vadd.f32 %v1903, %v2063
  %v2065 = vpop.f32.mrb[0].mxu0
  %v2066 = vpop.f32.mrb[0].mxu0
  %v2067 = vadd.f32 %v1906, %v2066
  %v2068 = vpop.f32.mrb[0].mxu0
  %2069 = vmatprep.mubr.bf16.mxu0 %v1225
  %2070 = vmatmul.mubr.bf16.gmra.mrb[0].mxu0 %v1224
  %v2071 = vpop.f32.mrb[0].mxu0
  %v2072 = vadd.f32 %v1911, %v2071
  %v2073 = vpop.f32.mrb[0].mxu0
  %v2074 = vpop.f32.mrb[0].mxu0
  %v2075 = vadd.f32 %v1914, %v2074
  %v2076 = vpop.f32.mrb[0].mxu0
  %2077 = vmatprep.mubr.bf16.mxu0 %v1237
  %2078 = vmatmul.mubr.bf16.gmra.mrb[0].mxu0 %v1236
  %v2079 = vpop.f32.mrb[0].mxu0
  %v2080 = vadd.f32 %v1919, %v2079
  %v2081 = vpop.f32.mrb[0].mxu0
  %v2082 = vpop.f32.mrb[0].mxu0
  %v2083 = vadd.f32 %v1922, %v2082
  %v2084 = vpop.f32.mrb[0].mxu0
  %2085 = vmatprep.mubr.bf16.mxu0 %v1249
  %2086 = vmatmul.mubr.bf16.gmra.mrb[0].mxu0 %v1248
  %v2087 = vpop.f32.mrb[0].mxu0
  %v2088 = vadd.f32 %v1927, %v2087
  %v2089 = vpop.f32.mrb[0].mxu0
  %v2090 = vpop.f32.mrb[0].mxu0
  %v2091 = vadd.f32 %v1930, %v2090
  %v2092 = vpop.f32.mrb[0].mxu0
  %2093 = vmatprep.mubr.bf16.mxu0 %v1261
  %2094 = vmatmul.mubr.bf16.gmra.mrb[0].mxu0 %v1260
  %v2095 = vpop.f32.mrb[0].mxu0
  %v2096 = vadd.f32 %v1935, %v2095
  %v2097 = vpop.f32.mrb[0].mxu0
  %v2098 = vpop.f32.mrb[0].mxu0
  %v2099 = vadd.f32 %v1938, %v2098
  %v2100 = vpop.f32.mrb[0].mxu0
  %2101 = vdwg.mxu0
  %2102 = vmatprep.subr.bf16.mxu0 0
  %2103 = vmatpush1.bf16.msra.mxu0 %v274
  %2104 = vmatprep.subr.bf16.mxu0 0
  %2105 = vmatpush1.bf16.msra.mxu0 %v275
  %2106 = vmatprep.subr.bf16.mxu0 0
  %2107 = vmatpush1.bf16.msra.mxu0 %v276
  %2108 = vmatprep.subr.bf16.mxu0 0
  %2109 = vmatpush1.bf16.msra.mxu0 %v277
  %2110 = vmatprep.subr.bf16.mxu0 0
  %2111 = vmatpush1.bf16.msra.mxu0 %v278
  %2112 = vmatprep.subr.bf16.mxu0 0
  %2113 = vmatpush1.bf16.msra.mxu0 %v279
  %2114 = vmatprep.subr.bf16.mxu0 0
  %2115 = vmatpush1.bf16.msra.mxu0 %v280
  %2116 = vmatprep.subr.bf16.mxu0 0
  %2117 = vmatpush1.bf16.msra.mxu0 %v281
  %2118 = vmatprep.subr.bf16.mxu0 0
  %2119 = vmatpush1.bf16.msra.mxu0 %v282
  %2120 = vmatprep.subr.bf16.mxu0 0
  %2121 = vmatpush1.bf16.msra.mxu0 %v283
  %2122 = vmatprep.subr.bf16.mxu0 0
  %2123 = vmatpush1.bf16.msra.mxu0 %v284
  %2124 = vmatprep.subr.bf16.mxu0 0
  %2125 = vmatpush1.bf16.msra.mxu0 %v285
  %2126 = vmatprep.subr.bf16.mxu0 0
  %2127 = vmatpush1.bf16.msra.mxu0 %v286
  %2128 = vmatprep.subr.bf16.mxu0 0
  %2129 = vmatpush1.bf16.msra.mxu0 %v287
  %2130 = vmatprep.subr.bf16.mxu0 0
  %2131 = vmatpush1.bf16.msra.mxu0 %v288
  %2132 = vmatprep.subr.bf16.mxu0 0
  %2133 = vmatpush1.bf16.msra.mxu0 %v289
  %2134 = vmatprep.mubr.bf16.mxu0 %v1083
  %2135 = vmatmul.mubr.bf16.gmra.mrb[0].mxu0 %v1082
  %v2136 = vpop.f32.mrb[0].mxu0
  %v2137 = vadd.f32 %v1976, %v2136
  %v2138 = vpop.f32.mrb[0].mxu0
  %v2139 = vpop.f32.mrb[0].mxu0
  %v2140 = vadd.f32 %v1979, %v2139
  %v2141 = vpop.f32.mrb[0].mxu0
  %2142 = vmatprep.mubr.bf16.mxu0 %v1095
  %2143 = vmatmul.mubr.bf16.gmra.mrb[0].mxu0 %v1094
  %v2144 = vpop.f32.mrb[0].mxu0
  %v2145 = vadd.f32 %v1984, %v2144
  %v2146 = vpop.f32.mrb[0].mxu0
  %v2147 = vpop.f32.mrb[0].mxu0
  %v2148 = vadd.f32 %v1987, %v2147
  %v2149 = vpop.f32.mrb[0].mxu0
  %2150 = vmatprep.mubr.bf16.mxu0 %v1107
  %2151 = vmatmul.mubr.bf16.gmra.mrb[0].mxu0 %v1106
  %v2152 = vpop.f32.mrb[0].mxu0
  %v2153 = vadd.f32 %v1992, %v2152
  %v2154 = vpop.f32.mrb[0].mxu0
  %v2155 = vpop.f32.mrb[0].mxu0
  %v2156 = vadd.f32 %v1995, %v2155
  %v2157 = vpop.f32.mrb[0].mxu0
  %2158 = vmatprep.mubr.bf16.mxu0 %v1119
  %2159 = vmatmul.mubr.bf16.gmra.mrb[0].mxu0 %v1118
  %v2160 = vpop.f32.mrb[0].mxu0
  %v2161 = vadd.f32 %v2000, %v2160
  %v2162 = vpop.f32.mrb[0].mxu0
  %v2163 = vpop.f32.mrb[0].mxu0
  %v2164 = vadd.f32 %v2003, %v2163
  %v2165 = vpop.f32.mrb[0].mxu0
  %2166 = vmatprep.mubr.bf16.mxu0 %v1131
  %2167 = vmatmul.mubr.bf16.gmra.mrb[0].mxu0 %v1130
  %v2168 = vpop.f32.mrb[0].mxu0
  %v2169 = vadd.f32 %v2008, %v2168
  %v2170 = vpop.f32.mrb[0].mxu0
  %v2171 = vpop.f32.mrb[0].mxu0
  %v2172 = vadd.f32 %v2011, %v2171
  %v2173 = vpop.f32.mrb[0].mxu0
  %2174 = vmatprep.mubr.bf16.mxu0 %v1143
  %2175 = vmatmul.mubr.bf16.gmra.mrb[0].mxu0 %v1142
  %v2176 = vpop.f32.mrb[0].mxu0
  %v2177 = vadd.f32 %v2016, %v2176
  %v2178 = vpop.f32.mrb[0].mxu0
  %v2179 = vpop.f32.mrb[0].mxu0
  %v2180 = vadd.f32 %v2019, %v2179
  %v2181 = vpop.f32.mrb[0].mxu0
  %2182 = vmatprep.mubr.bf16.mxu0 %v1155
  %2183 = vmatmul.mubr.bf16.gmra.mrb[0].mxu0 %v1154
  %v2184 = vpop.f32.mrb[0].mxu0
  %v2185 = vadd.f32 %v2024, %v2184
  %v2186 = vpop.f32.mrb[0].mxu0
  %v2187 = vpop.f32.mrb[0].mxu0
  %v2188 = vadd.f32 %v2027, %v2187
  %v2189 = vpop.f32.mrb[0].mxu0
  %2190 = vmatprep.mubr.bf16.mxu0 %v1167
  %2191 = vmatmul.mubr.bf16.gmra.mrb[0].mxu0 %v1166
  %v2192 = vpop.f32.mrb[0].mxu0
  %v2193 = vadd.f32 %v2032, %v2192
  %v2194 = vpop.f32.mrb[0].mxu0
  %v2195 = vpop.f32.mrb[0].mxu0
  %v2196 = vadd.f32 %v2035, %v2195
  %v2197 = vpop.f32.mrb[0].mxu0
  %2198 = vmatprep.mubr.bf16.mxu0 %v1179
  %2199 = vmatmul.mubr.bf16.gmra.mrb[0].mxu0 %v1178
  %v2200 = vpop.f32.mrb[0].mxu0
  %v2201 = vadd.f32 %v2040, %v2200
  %v2202 = vpop.f32.mrb[0].mxu0
  %v2203 = vpop.f32.mrb[0].mxu0
  %v2204 = vadd.f32 %v2043, %v2203
  %v2205 = vpop.f32.mrb[0].mxu0
  %2206 = vmatprep.mubr.bf16.mxu0 %v1191
  %2207 = vmatmul.mubr.bf16.gmra.mrb[0].mxu0 %v1190
  %v2208 = vpop.f32.mrb[0].mxu0
  %v2209 = vadd.f32 %v2048, %v2208
  %v2210 = vpop.f32.mrb[0].mxu0
  %v2211 = vpop.f32.mrb[0].mxu0
  %v2212 = vadd.f32 %v2051, %v2211
  %v2213 = vpop.f32.mrb[0].mxu0
  %2214 = vmatprep.mubr.bf16.mxu0 %v1203
  %2215 = vmatmul.mubr.bf16.gmra.mrb[0].mxu0 %v1202
  %v2216 = vpop.f32.mrb[0].mxu0
  %v2217 = vadd.f32 %v2056, %v2216
  %v2218 = vpop.f32.mrb[0].mxu0
  %v2219 = vpop.f32.mrb[0].mxu0
  %v2220 = vadd.f32 %v2059, %v2219
  %v2221 = vpop.f32.mrb[0].mxu0
  %2222 = vmatprep.mubr.bf16.mxu0 %v1215
  %2223 = vmatmul.mubr.bf16.gmra.mrb[0].mxu0 %v1214
  %v2224 = vpop.f32.mrb[0].mxu0
  %v2225 = vadd.f32 %v2064, %v2224
  %v2226 = vpop.f32.mrb[0].mxu0
  %v2227 = vpop.f32.mrb[0].mxu0
  %v2228 = vadd.f32 %v2067, %v2227
  %v2229 = vpop.f32.mrb[0].mxu0
  %2230 = vmatprep.mubr.bf16.mxu0 %v1227
  %2231 = vmatmul.mubr.bf16.gmra.mrb[0].mxu0 %v1226
  %v2232 = vpop.f32.mrb[0].mxu0
  %v2233 = vadd.f32 %v2072, %v2232
  %v2234 = vpop.f32.mrb[0].mxu0
  %v2235 = vpop.f32.mrb[0].mxu0
  %v2236 = vadd.f32 %v2075, %v2235
  %v2237 = vpop.f32.mrb[0].mxu0
  %2238 = vmatprep.mubr.bf16.mxu0 %v1239
  %2239 = vmatmul.mubr.bf16.gmra.mrb[0].mxu0 %v1238
  %v2240 = vpop.f32.mrb[0].mxu0
  %v2241 = vadd.f32 %v2080, %v2240
  %v2242 = vpop.f32.mrb[0].mxu0
  %v2243 = vpop.f32.mrb[0].mxu0
  %v2244 = vadd.f32 %v2083, %v2243
  %v2245 = vpop.f32.mrb[0].mxu0
  %2246 = vmatprep.mubr.bf16.mxu0 %v1251
  %2247 = vmatmul.mubr.bf16.gmra.mrb[0].mxu0 %v1250
  %v2248 = vpop.f32.mrb[0].mxu0
  %v2249 = vadd.f32 %v2088, %v2248
  %v2250 = vpop.f32.mrb[0].mxu0
  %v2251 = vpop.f32.mrb[0].mxu0
  %v2252 = vadd.f32 %v2091, %v2251
  %v2253 = vpop.f32.mrb[0].mxu0
  %2254 = vmatprep.mubr.bf16.mxu0 %v1263
  %2255 = vmatmul.mubr.bf16.gmra.mrb[0].mxu0 %v1262
  %v2256 = vpop.f32.mrb[0].mxu0
  %v2257 = vadd.f32 %v2096, %v2256
  %v2258 = vpop.f32.mrb[0].mxu0
  %v2259 = vpop.f32.mrb[0].mxu0
  %v2260 = vadd.f32 %v2099, %v2259
  %v2261 = vpop.f32.mrb[0].mxu0
  %2262 = vdwg.mxu0
  %2263 = vmatprep.subr.bf16.mxu0 0
  %2264 = vmatpush1.bf16.msra.mxu0 %v290
  %2265 = vmatprep.subr.bf16.mxu0 0
  %2266 = vmatpush1.bf16.msra.mxu0 %v291
  %2267 = vmatprep.subr.bf16.mxu0 0
  %2268 = vmatpush1.bf16.msra.mxu0 %v292
  %2269 = vmatprep.subr.bf16.mxu0 0
  %2270 = vmatpush1.bf16.msra.mxu0 %v293
  %2271 = vmatprep.subr.bf16.mxu0 0
  %2272 = vmatpush1.bf16.msra.mxu0 %v294
  %2273 = vmatprep.subr.bf16.mxu0 0
  %2274 = vmatpush1.bf16.msra.mxu0 %v295
  %2275 = vmatprep.subr.bf16.mxu0 0
  %2276 = vmatpush1.bf16.msra.mxu0 %v296
  %2277 = vmatprep.subr.bf16.mxu0 0
  %2278 = vmatpush1.bf16.msra.mxu0 %v297
  %2279 = vmatprep.subr.bf16.mxu0 0
  %2280 = vmatpush1.bf16.msra.mxu0 %v298
  %2281 = vmatprep.subr.bf16.mxu0 0
  %2282 = vmatpush1.bf16.msra.mxu0 %v299
  %2283 = vmatprep.subr.bf16.mxu0 0
  %2284 = vmatpush1.bf16.msra.mxu0 %v300
  %2285 = vmatprep.subr.bf16.mxu0 0
  %2286 = vmatpush1.bf16.msra.mxu0 %v301
  %2287 = vmatprep.subr.bf16.mxu0 0
  %2288 = vmatpush1.bf16.msra.mxu0 %v302
  %2289 = vmatprep.subr.bf16.mxu0 0
  %2290 = vmatpush1.bf16.msra.mxu0 %v303
  %2291 = vmatprep.subr.bf16.mxu0 0
  %2292 = vmatpush1.bf16.msra.mxu0 %v304
  %2293 = vmatprep.subr.bf16.mxu0 0
  %2294 = vmatpush1.bf16.msra.mxu0 %v305
  %2295 = vmatprep.mubr.bf16.mxu0 %v1085
  %2296 = vmatmul.mubr.bf16.gmra.mrb[0].mxu0 %v1084
  %v2297 = vpop.f32.mrb[0].mxu0
  %v2298 = vadd.f32 %v2137, %v2297
  %v2299 = vpop.f32.mrb[0].mxu0
  %v2300 = vpop.f32.mrb[0].mxu0
  %v2301 = vadd.f32 %v2140, %v2300
  %v2302 = vpop.f32.mrb[0].mxu0
  %2303 = vmatprep.mubr.bf16.mxu0 %v1097
  %2304 = vmatmul.mubr.bf16.gmra.mrb[0].mxu0 %v1096
  %v2305 = vpop.f32.mrb[0].mxu0
  %v2306 = vadd.f32 %v2145, %v2305
  %v2307 = vpop.f32.mrb[0].mxu0
  %v2308 = vpop.f32.mrb[0].mxu0
  %v2309 = vadd.f32 %v2148, %v2308
  %v2310 = vpop.f32.mrb[0].mxu0
  %2311 = vmatprep.mubr.bf16.mxu0 %v1109
  %2312 = vmatmul.mubr.bf16.gmra.mrb[0].mxu0 %v1108
  %v2313 = vpop.f32.mrb[0].mxu0
  %v2314 = vadd.f32 %v2153, %v2313
  %v2315 = vpop.f32.mrb[0].mxu0
  %v2316 = vpop.f32.mrb[0].mxu0
  %v2317 = vadd.f32 %v2156, %v2316
  %v2318 = vpop.f32.mrb[0].mxu0
  %2319 = vmatprep.mubr.bf16.mxu0 %v1121
  %2320 = vmatmul.mubr.bf16.gmra.mrb[0].mxu0 %v1120
  %v2321 = vpop.f32.mrb[0].mxu0
  %v2322 = vadd.f32 %v2161, %v2321
  %v2323 = vpop.f32.mrb[0].mxu0
  %v2324 = vpop.f32.mrb[0].mxu0
  %v2325 = vadd.f32 %v2164, %v2324
  %v2326 = vpop.f32.mrb[0].mxu0
  %2327 = vmatprep.mubr.bf16.mxu0 %v1133
  %2328 = vmatmul.mubr.bf16.gmra.mrb[0].mxu0 %v1132
  %v2329 = vpop.f32.mrb[0].mxu0
  %v2330 = vadd.f32 %v2169, %v2329
  %v2331 = vpop.f32.mrb[0].mxu0
  %v2332 = vpop.f32.mrb[0].mxu0
  %v2333 = vadd.f32 %v2172, %v2332
  %v2334 = vpop.f32.mrb[0].mxu0
  %2335 = vmatprep.mubr.bf16.mxu0 %v1145
  %2336 = vmatmul.mubr.bf16.gmra.mrb[0].mxu0 %v1144
  %v2337 = vpop.f32.mrb[0].mxu0
  %v2338 = vadd.f32 %v2177, %v2337
  %v2339 = vpop.f32.mrb[0].mxu0
  %v2340 = vpop.f32.mrb[0].mxu0
  %v2341 = vadd.f32 %v2180, %v2340
  %v2342 = vpop.f32.mrb[0].mxu0
  %2343 = vmatprep.mubr.bf16.mxu0 %v1157
  %2344 = vmatmul.mubr.bf16.gmra.mrb[0].mxu0 %v1156
  %v2345 = vpop.f32.mrb[0].mxu0
  %v2346 = vadd.f32 %v2185, %v2345
  %v2347 = vpop.f32.mrb[0].mxu0
  %v2348 = vpop.f32.mrb[0].mxu0
  %v2349 = vadd.f32 %v2188, %v2348
  %v2350 = vpop.f32.mrb[0].mxu0
  %2351 = vmatprep.mubr.bf16.mxu0 %v1169
  %2352 = vmatmul.mubr.bf16.gmra.mrb[0].mxu0 %v1168
  %v2353 = vpop.f32.mrb[0].mxu0
  %v2354 = vadd.f32 %v2193, %v2353
  %v2355 = vpop.f32.mrb[0].mxu0
  %v2356 = vpop.f32.mrb[0].mxu0
  %v2357 = vadd.f32 %v2196, %v2356
  %v2358 = vpop.f32.mrb[0].mxu0
  %2359 = vmatprep.mubr.bf16.mxu0 %v1181
  %2360 = vmatmul.mubr.bf16.gmra.mrb[0].mxu0 %v1180
  %v2361 = vpop.f32.mrb[0].mxu0
  %v2362 = vadd.f32 %v2201, %v2361
  %v2363 = vpop.f32.mrb[0].mxu0
  %v2364 = vpop.f32.mrb[0].mxu0
  %v2365 = vadd.f32 %v2204, %v2364
  %v2366 = vpop.f32.mrb[0].mxu0
  %2367 = vmatprep.mubr.bf16.mxu0 %v1193
  %2368 = vmatmul.mubr.bf16.gmra.mrb[0].mxu0 %v1192
  %v2369 = vpop.f32.mrb[0].mxu0
  %v2370 = vadd.f32 %v2209, %v2369
  %v2371 = vpop.f32.mrb[0].mxu0
  %v2372 = vpop.f32.mrb[0].mxu0
  %v2373 = vadd.f32 %v2212, %v2372
  %v2374 = vpop.f32.mrb[0].mxu0
  %2375 = vmatprep.mubr.bf16.mxu0 %v1205
  %2376 = vmatmul.mubr.bf16.gmra.mrb[0].mxu0 %v1204
  %v2377 = vpop.f32.mrb[0].mxu0
  %v2378 = vadd.f32 %v2217, %v2377
  %v2379 = vpop.f32.mrb[0].mxu0
  %v2380 = vpop.f32.mrb[0].mxu0
  %v2381 = vadd.f32 %v2220, %v2380
  %v2382 = vpop.f32.mrb[0].mxu0
  %2383 = vmatprep.mubr.bf16.mxu0 %v1217
  %2384 = vmatmul.mubr.bf16.gmra.mrb[0].mxu0 %v1216
  %v2385 = vpop.f32.mrb[0].mxu0
  %v2386 = vadd.f32 %v2225, %v2385
  %v2387 = vpop.f32.mrb[0].mxu0
  %v2388 = vpop.f32.mrb[0].mxu0
  %v2389 = vadd.f32 %v2228, %v2388
  %v2390 = vpop.f32.mrb[0].mxu0
  %2391 = vmatprep.mubr.bf16.mxu0 %v1229
  %2392 = vmatmul.mubr.bf16.gmra.mrb[0].mxu0 %v1228
  %v2393 = vpop.f32.mrb[0].mxu0
  %v2394 = vadd.f32 %v2233, %v2393
  %v2395 = vpop.f32.mrb[0].mxu0
  %v2396 = vpop.f32.mrb[0].mxu0
  %v2397 = vadd.f32 %v2236, %v2396
  %v2398 = vpop.f32.mrb[0].mxu0
  %2399 = vmatprep.mubr.bf16.mxu0 %v1241
  %2400 = vmatmul.mubr.bf16.gmra.mrb[0].mxu0 %v1240
  %v2401 = vpop.f32.mrb[0].mxu0
  %v2402 = vadd.f32 %v2241, %v2401
  %v2403 = vpop.f32.mrb[0].mxu0
  %v2404 = vpop.f32.mrb[0].mxu0
  %v2405 = vadd.f32 %v2244, %v2404
  %v2406 = vpop.f32.mrb[0].mxu0
  %2407 = vmatprep.mubr.bf16.mxu0 %v1253
  %2408 = vmatmul.mubr.bf16.gmra.mrb[0].mxu0 %v1252
  %v2409 = vpop.f32.mrb[0].mxu0
  %v2410 = vadd.f32 %v2249, %v2409
  %v2411 = vpop.f32.mrb[0].mxu0
  %v2412 = vpop.f32.mrb[0].mxu0
  %v2413 = vadd.f32 %v2252, %v2412
  %v2414 = vpop.f32.mrb[0].mxu0
  %2415 = vmatprep.mubr.bf16.mxu0 %v1265
  %2416 = vmatmul.mubr.bf16.gmra.mrb[0].mxu0 %v1264
  %v2417 = vpop.f32.mrb[0].mxu0
  %v2418 = vadd.f32 %v2257, %v2417
  %v2419 = vpop.f32.mrb[0].mxu0
  %v2420 = vpop.f32.mrb[0].mxu0
  %v2421 = vadd.f32 %v2260, %v2420
  %v2422 = vpop.f32.mrb[0].mxu0
  %2423 = vdwg.mxu0
  %vm2424 = vcmask 400384
  %v2425 = vsel %vm2424, %v2298, 0.0
  %2426 = vadd.xlane.f32.xlu0 %v2425
  %v2427 = vpop.xlane.xlu0 %2426
  %v2428 = vsel %vm2424, %v2301, 0.0
  %2429 = vadd.xlane.f32.xlu0 %v2428
  %v2430 = vpop.xlane.xlu0 %2429
  %v2431 = vsel %vm2424, %v2306, 0.0
  %2432 = vadd.xlane.f32.xlu0 %v2431
  %v2433 = vpop.xlane.xlu0 %2432
  %v2434 = vsel %vm2424, %v2309, 0.0
  %2435 = vadd.xlane.f32.xlu0 %v2434
  %v2436 = vpop.xlane.xlu0 %2435
  %v2437 = vsel %vm2424, %v2314, 0.0
  %2438 = vadd.xlane.f32.xlu0 %v2437
  %v2439 = vpop.xlane.xlu0 %2438
  %v2440 = vsel %vm2424, %v2317, 0.0
  %2441 = vadd.xlane.f32.xlu0 %v2440
  %v2442 = vpop.xlane.xlu0 %2441
  %v2443 = vsel %vm2424, %v2322, 0.0
  %2444 = vadd.xlane.f32.xlu0 %v2443
  %v2445 = vpop.xlane.xlu0 %2444
  %v2446 = vsel %vm2424, %v2325, 0.0
  %2447 = vadd.xlane.f32.xlu0 %v2446
  %v2448 = vpop.xlane.xlu0 %2447
  %v2449 = vsel %vm2424, %v2330, 0.0
  %2450 = vadd.xlane.f32.xlu0 %v2449
  %v2451 = vpop.xlane.xlu0 %2450
  %v2452 = vsel %vm2424, %v2333, 0.0
  %2453 = vadd.xlane.f32.xlu0 %v2452
  %v2454 = vpop.xlane.xlu0 %2453
  %v2455 = vsel %vm2424, %v2338, 0.0
  %2456 = vadd.xlane.f32.xlu0 %v2455
  %v2457 = vpop.xlane.xlu0 %2456
  %v2458 = vsel %vm2424, %v2341, 0.0
  %2459 = vadd.xlane.f32.xlu0 %v2458
  %v2460 = vpop.xlane.xlu0 %2459
  %v2461 = vsel %vm2424, %v2346, 0.0
  %2462 = vadd.xlane.f32.xlu0 %v2461
  %v2463 = vpop.xlane.xlu0 %2462
  %v2464 = vsel %vm2424, %v2349, 0.0
  %2465 = vadd.xlane.f32.xlu0 %v2464
  %v2466 = vpop.xlane.xlu0 %2465
  %v2467 = vsel %vm2424, %v2354, 0.0
  %2468 = vadd.xlane.f32.xlu0 %v2467
  %v2469 = vpop.xlane.xlu0 %2468
  %v2470 = vsel %vm2424, %v2357, 0.0
  %2471 = vadd.xlane.f32.xlu0 %v2470
  %v2472 = vpop.xlane.xlu0 %2471
  %v2473 = vsel %vm2424, %v2362, 0.0
  %2474 = vadd.xlane.f32.xlu0 %v2473
  %v2475 = vpop.xlane.xlu0 %2474
  %v2476 = vsel %vm2424, %v2365, 0.0
  %2477 = vadd.xlane.f32.xlu0 %v2476
  %v2478 = vpop.xlane.xlu0 %2477
  %v2479 = vsel %vm2424, %v2370, 0.0
  %2480 = vadd.xlane.f32.xlu0 %v2479
  %v2481 = vpop.xlane.xlu0 %2480
  %v2482 = vsel %vm2424, %v2373, 0.0
  %2483 = vadd.xlane.f32.xlu0 %v2482
  %v2484 = vpop.xlane.xlu0 %2483
  %v2485 = vsel %vm2424, %v2378, 0.0
  %2486 = vadd.xlane.f32.xlu0 %v2485
  %v2487 = vpop.xlane.xlu0 %2486
  %v2488 = vsel %vm2424, %v2381, 0.0
  %2489 = vadd.xlane.f32.xlu0 %v2488
  %v2490 = vpop.xlane.xlu0 %2489
  %v2491 = vsel %vm2424, %v2386, 0.0
  %2492 = vadd.xlane.f32.xlu0 %v2491
  %v2493 = vpop.xlane.xlu0 %2492
  %v2494 = vsel %vm2424, %v2389, 0.0
  %2495 = vadd.xlane.f32.xlu0 %v2494
  %v2496 = vpop.xlane.xlu0 %2495
  %v2497 = vsel %vm2424, %v2394, 0.0
  %2498 = vadd.xlane.f32.xlu0 %v2497
  %v2499 = vpop.xlane.xlu0 %2498
  %v2500 = vsel %vm2424, %v2397, 0.0
  %2501 = vadd.xlane.f32.xlu0 %v2500
  %v2502 = vpop.xlane.xlu0 %2501
  %v2503 = vsel %vm2424, %v2402, 0.0
  %2504 = vadd.xlane.f32.xlu0 %v2503
  %v2505 = vpop.xlane.xlu0 %2504
  %v2506 = vsel %vm2424, %v2405, 0.0
  %2507 = vadd.xlane.f32.xlu0 %v2506
  %v2508 = vpop.xlane.xlu0 %2507
  %v2509 = vsel %vm2424, %v2410, 0.0
  %2510 = vadd.xlane.f32.xlu0 %v2509
  %v2511 = vpop.xlane.xlu0 %2510
  %v2512 = vsel %vm2424, %v2413, 0.0
  %2513 = vadd.xlane.f32.xlu0 %v2512
  %v2514 = vpop.xlane.xlu0 %2513
  %v2515 = vsel %vm2424, %v2418, 0.0
  %2516 = vadd.xlane.f32.xlu0 %v2515
  %v2517 = vpop.xlane.xlu0 %2516
  %v2518 = vsel %vm2424, %v2421, 0.0
  %2519 = vadd.xlane.f32.xlu0 %v2518
  %v2520 = vpop.xlane.xlu0 %2519
  %v2521 = vmul.f32 %v2427, 0.020408163
  %v2522 = vmul.f32 %v2430, 0.020408163
  %v2523 = vmul.f32 %v2433, 0.020408163
  %v2524 = vmul.f32 %v2436, 0.020408163
  %v2525 = vmul.f32 %v2439, 0.020408163
  %v2526 = vmul.f32 %v2442, 0.020408163
  %v2527 = vmul.f32 %v2445, 0.020408163
  %v2528 = vmul.f32 %v2448, 0.020408163
  %v2529 = vmul.f32 %v2451, 0.020408163
  %v2530 = vmul.f32 %v2454, 0.020408163
  %v2531 = vmul.f32 %v2457, 0.020408163
  %v2532 = vmul.f32 %v2460, 0.020408163
  %v2533 = vmul.f32 %v2463, 0.020408163
  %v2534 = vmul.f32 %v2466, 0.020408163
  %v2535 = vmul.f32 %v2469, 0.020408163
  %v2536 = vmul.f32 %v2472, 0.020408163
  %v2537 = vmul.f32 %v2475, 0.020408163
  %v2538 = vmul.f32 %v2478, 0.020408163
  %v2539 = vmul.f32 %v2481, 0.020408163
  %v2540 = vmul.f32 %v2484, 0.020408163
  %v2541 = vmul.f32 %v2487, 0.020408163
  %v2542 = vmul.f32 %v2490, 0.020408163
  %v2543 = vmul.f32 %v2493, 0.020408163
  %v2544 = vmul.f32 %v2496, 0.020408163
  %v2545 = vmul.f32 %v2499, 0.020408163
  %v2546 = vmul.f32 %v2502, 0.020408163
  %v2547 = vmul.f32 %v2505, 0.020408163
  %v2548 = vmul.f32 %v2508, 0.020408163
  %v2549 = vmul.f32 %v2511, 0.020408163
  %v2550 = vmul.f32 %v2514, 0.020408163
  %v2551 = vmul.f32 %v2517, 0.020408163
  %v2552 = vmul.f32 %v2520, 0.020408163
  %v2553 = vmul.f32 %v2298, %v2298
  %v2554 = vmul.f32 %v2301, %v2301
  %v2555 = vmul.f32 %v2306, %v2306
  %v2556 = vmul.f32 %v2309, %v2309
  %v2557 = vmul.f32 %v2314, %v2314
  %v2558 = vmul.f32 %v2317, %v2317
  %v2559 = vmul.f32 %v2322, %v2322
  %v2560 = vmul.f32 %v2325, %v2325
  %v2561 = vmul.f32 %v2330, %v2330
  %v2562 = vmul.f32 %v2333, %v2333
  %v2563 = vmul.f32 %v2338, %v2338
  %v2564 = vmul.f32 %v2341, %v2341
  %v2565 = vmul.f32 %v2346, %v2346
  %v2566 = vmul.f32 %v2349, %v2349
  %v2567 = vmul.f32 %v2354, %v2354
  %v2568 = vmul.f32 %v2357, %v2357
  %v2569 = vmul.f32 %v2362, %v2362
  %v2570 = vmul.f32 %v2365, %v2365
  %v2571 = vmul.f32 %v2370, %v2370
  %v2572 = vmul.f32 %v2373, %v2373
  %v2573 = vmul.f32 %v2378, %v2378
  %v2574 = vmul.f32 %v2381, %v2381
  %v2575 = vmul.f32 %v2386, %v2386
  %v2576 = vmul.f32 %v2389, %v2389
  %v2577 = vmul.f32 %v2394, %v2394
  %v2578 = vmul.f32 %v2397, %v2397
  %v2579 = vmul.f32 %v2402, %v2402
  %v2580 = vmul.f32 %v2405, %v2405
  %v2581 = vmul.f32 %v2410, %v2410
  %v2582 = vmul.f32 %v2413, %v2413
  %v2583 = vmul.f32 %v2418, %v2418
  %v2584 = vmul.f32 %v2421, %v2421
  %v2585 = vsel %vm2424, %v2553, 0.0
  %2586 = vadd.xlane.f32.xlu0 %v2585
  %v2587 = vpop.xlane.xlu0 %2586
  %v2588 = vsel %vm2424, %v2554, 0.0
  %2589 = vadd.xlane.f32.xlu0 %v2588
  %v2590 = vpop.xlane.xlu0 %2589
  %v2591 = vsel %vm2424, %v2555, 0.0
  %2592 = vadd.xlane.f32.xlu0 %v2591
  %v2593 = vpop.xlane.xlu0 %2592
  %v2594 = vsel %vm2424, %v2556, 0.0
  %2595 = vadd.xlane.f32.xlu0 %v2594
  %v2596 = vpop.xlane.xlu0 %2595
  %v2597 = vsel %vm2424, %v2557, 0.0
  %2598 = vadd.xlane.f32.xlu0 %v2597
  %v2599 = vpop.xlane.xlu0 %2598
  %v2600 = vsel %vm2424, %v2558, 0.0
  %2601 = vadd.xlane.f32.xlu0 %v2600
  %v2602 = vpop.xlane.xlu0 %2601
  %v2603 = vsel %vm2424, %v2559, 0.0
  %2604 = vadd.xlane.f32.xlu0 %v2603
  %v2605 = vpop.xlane.xlu0 %2604
  %v2606 = vsel %vm2424, %v2560, 0.0
  %2607 = vadd.xlane.f32.xlu0 %v2606
  %v2608 = vpop.xlane.xlu0 %2607
  %v2609 = vsel %vm2424, %v2561, 0.0
  %2610 = vadd.xlane.f32.xlu0 %v2609
  %v2611 = vpop.xlane.xlu0 %2610
  %v2612 = vsel %vm2424, %v2562, 0.0
  %2613 = vadd.xlane.f32.xlu0 %v2612
  %v2614 = vpop.xlane.xlu0 %2613
  %v2615 = vsel %vm2424, %v2563, 0.0
  %2616 = vadd.xlane.f32.xlu0 %v2615
  %v2617 = vpop.xlane.xlu0 %2616
  %v2618 = vsel %vm2424, %v2564, 0.0
  %2619 = vadd.xlane.f32.xlu0 %v2618
  %v2620 = vpop.xlane.xlu0 %2619
  %v2621 = vsel %vm2424, %v2565, 0.0
  %2622 = vadd.xlane.f32.xlu0 %v2621
  %v2623 = vpop.xlane.xlu0 %2622
  %v2624 = vsel %vm2424, %v2566, 0.0
  %2625 = vadd.xlane.f32.xlu0 %v2624
  %v2626 = vpop.xlane.xlu0 %2625
  %v2627 = vsel %vm2424, %v2567, 0.0
  %2628 = vadd.xlane.f32.xlu0 %v2627
  %v2629 = vpop.xlane.xlu0 %2628
  %v2630 = vsel %vm2424, %v2568, 0.0
  %2631 = vadd.xlane.f32.xlu0 %v2630
  %v2632 = vpop.xlane.xlu0 %2631
  %v2633 = vsel %vm2424, %v2569, 0.0
  %2634 = vadd.xlane.f32.xlu0 %v2633
  %v2635 = vpop.xlane.xlu0 %2634
  %v2636 = vsel %vm2424, %v2570, 0.0
  %2637 = vadd.xlane.f32.xlu0 %v2636
  %v2638 = vpop.xlane.xlu0 %2637
  %v2639 = vsel %vm2424, %v2571, 0.0
  %2640 = vadd.xlane.f32.xlu0 %v2639
  %v2641 = vpop.xlane.xlu0 %2640
  %v2642 = vsel %vm2424, %v2572, 0.0
  %2643 = vadd.xlane.f32.xlu0 %v2642
  %v2644 = vpop.xlane.xlu0 %2643
  %v2645 = vsel %vm2424, %v2573, 0.0
  %2646 = vadd.xlane.f32.xlu0 %v2645
  %v2647 = vpop.xlane.xlu0 %2646
  %v2648 = vsel %vm2424, %v2574, 0.0
  %2649 = vadd.xlane.f32.xlu0 %v2648
  %v2650 = vpop.xlane.xlu0 %2649
  %v2651 = vsel %vm2424, %v2575, 0.0
  %2652 = vadd.xlane.f32.xlu0 %v2651
  %v2653 = vpop.xlane.xlu0 %2652
  %v2654 = vsel %vm2424, %v2576, 0.0
  %2655 = vadd.xlane.f32.xlu0 %v2654
  %v2656 = vpop.xlane.xlu0 %2655
  %v2657 = vsel %vm2424, %v2577, 0.0
  %2658 = vadd.xlane.f32.xlu0 %v2657
  %v2659 = vpop.xlane.xlu0 %2658
  %v2660 = vsel %vm2424, %v2578, 0.0
  %2661 = vadd.xlane.f32.xlu0 %v2660
  %v2662 = vpop.xlane.xlu0 %2661
  %v2663 = vsel %vm2424, %v2579, 0.0
  %2664 = vadd.xlane.f32.xlu0 %v2663
  %v2665 = vpop.xlane.xlu0 %2664
  %v2666 = vsel %vm2424, %v2580, 0.0
  %2667 = vadd.xlane.f32.xlu0 %v2666
  %v2668 = vpop.xlane.xlu0 %2667
  %v2669 = vsel %vm2424, %v2581, 0.0
  %2670 = vadd.xlane.f32.xlu0 %v2669
  %v2671 = vpop.xlane.xlu0 %2670
  %v2672 = vsel %vm2424, %v2582, 0.0
  %2673 = vadd.xlane.f32.xlu0 %v2672
  %v2674 = vpop.xlane.xlu0 %2673
  %v2675 = vsel %vm2424, %v2583, 0.0
  %2676 = vadd.xlane.f32.xlu0 %v2675
  %v2677 = vpop.xlane.xlu0 %2676
  %v2678 = vsel %vm2424, %v2584, 0.0
  %2679 = vadd.xlane.f32.xlu0 %v2678
  %v2680 = vpop.xlane.xlu0 %2679
  %v2681 = vmul.f32 %v2587, 0.020408163
  %v2682 = vmul.f32 %v2590, 0.020408163
  %v2683 = vmul.f32 %v2593, 0.020408163
  %v2684 = vmul.f32 %v2596, 0.020408163
  %v2685 = vmul.f32 %v2599, 0.020408163
  %v2686 = vmul.f32 %v2602, 0.020408163
  %v2687 = vmul.f32 %v2605, 0.020408163
  %v2688 = vmul.f32 %v2608, 0.020408163
  %v2689 = vmul.f32 %v2611, 0.020408163
  %v2690 = vmul.f32 %v2614, 0.020408163
  %v2691 = vmul.f32 %v2617, 0.020408163
  %v2692 = vmul.f32 %v2620, 0.020408163
  %v2693 = vmul.f32 %v2623, 0.020408163
  %v2694 = vmul.f32 %v2626, 0.020408163
  %v2695 = vmul.f32 %v2629, 0.020408163
  %v2696 = vmul.f32 %v2632, 0.020408163
  %v2697 = vmul.f32 %v2635, 0.020408163
  %v2698 = vmul.f32 %v2638, 0.020408163
  %v2699 = vmul.f32 %v2641, 0.020408163
  %v2700 = vmul.f32 %v2644, 0.020408163
  %v2701 = vmul.f32 %v2647, 0.020408163
  %v2702 = vmul.f32 %v2650, 0.020408163
  %v2703 = vmul.f32 %v2653, 0.020408163
  %v2704 = vmul.f32 %v2656, 0.020408163
  %v2705 = vmul.f32 %v2659, 0.020408163
  %v2706 = vmul.f32 %v2662, 0.020408163
  %v2707 = vmul.f32 %v2665, 0.020408163
  %v2708 = vmul.f32 %v2668, 0.020408163
  %v2709 = vmul.f32 %v2671, 0.020408163
  %v2710 = vmul.f32 %v2674, 0.020408163
  %v2711 = vmul.f32 %v2677, 0.020408163
  %v2712 = vmul.f32 %v2680, 0.020408163
  %v2713 = vmul.f32 %v2521, %v2521
  %v2714 = vmul.f32 %v2522, %v2522
  %v2715 = vmul.f32 %v2523, %v2523
  %v2716 = vmul.f32 %v2524, %v2524
  %v2717 = vmul.f32 %v2525, %v2525
  %v2718 = vmul.f32 %v2526, %v2526
  %v2719 = vmul.f32 %v2527, %v2527
  %v2720 = vmul.f32 %v2528, %v2528
  %v2721 = vmul.f32 %v2529, %v2529
  %v2722 = vmul.f32 %v2530, %v2530
  %v2723 = vmul.f32 %v2531, %v2531
  %v2724 = vmul.f32 %v2532, %v2532
  %v2725 = vmul.f32 %v2533, %v2533
  %v2726 = vmul.f32 %v2534, %v2534
  %v2727 = vmul.f32 %v2535, %v2535
  %v2728 = vmul.f32 %v2536, %v2536
  %v2729 = vmul.f32 %v2537, %v2537
  %v2730 = vmul.f32 %v2538, %v2538
  %v2731 = vmul.f32 %v2539, %v2539
  %v2732 = vmul.f32 %v2540, %v2540
  %v2733 = vmul.f32 %v2541, %v2541
  %v2734 = vmul.f32 %v2542, %v2542
  %v2735 = vmul.f32 %v2543, %v2543
  %v2736 = vmul.f32 %v2544, %v2544
  %v2737 = vmul.f32 %v2545, %v2545
  %v2738 = vmul.f32 %v2546, %v2546
  %v2739 = vmul.f32 %v2547, %v2547
  %v2740 = vmul.f32 %v2548, %v2548
  %v2741 = vmul.f32 %v2549, %v2549
  %v2742 = vmul.f32 %v2550, %v2550
  %v2743 = vmul.f32 %v2551, %v2551
  %v2744 = vmul.f32 %v2552, %v2552
  %v2745 = vsub.f32 %v2681, %v2713
  %v2746 = vsub.f32 %v2682, %v2714
  %v2747 = vsub.f32 %v2683, %v2715
  %v2748 = vsub.f32 %v2684, %v2716
  %v2749 = vsub.f32 %v2685, %v2717
  %v2750 = vsub.f32 %v2686, %v2718
  %v2751 = vsub.f32 %v2687, %v2719
  %v2752 = vsub.f32 %v2688, %v2720
  %v2753 = vsub.f32 %v2689, %v2721
  %v2754 = vsub.f32 %v2690, %v2722
  %v2755 = vsub.f32 %v2691, %v2723
  %v2756 = vsub.f32 %v2692, %v2724
  %v2757 = vsub.f32 %v2693, %v2725
  %v2758 = vsub.f32 %v2694, %v2726
  %v2759 = vsub.f32 %v2695, %v2727
  %v2760 = vsub.f32 %v2696, %v2728
  %v2761 = vsub.f32 %v2697, %v2729
  %v2762 = vsub.f32 %v2698, %v2730
  %v2763 = vsub.f32 %v2699, %v2731
  %v2764 = vsub.f32 %v2700, %v2732
  %v2765 = vsub.f32 %v2701, %v2733
  %v2766 = vsub.f32 %v2702, %v2734
  %v2767 = vsub.f32 %v2703, %v2735
  %v2768 = vsub.f32 %v2704, %v2736
  %v2769 = vsub.f32 %v2705, %v2737
  %v2770 = vsub.f32 %v2706, %v2738
  %v2771 = vsub.f32 %v2707, %v2739
  %v2772 = vsub.f32 %v2708, %v2740
  %v2773 = vsub.f32 %v2709, %v2741
  %v2774 = vsub.f32 %v2710, %v2742
  %v2775 = vsub.f32 %v2711, %v2743
  %v2776 = vsub.f32 %v2712, %v2744
  %v2777 = vadd.f32 %v2745, 0.001
  %v2778 = vadd.f32 %v2746, 0.001
  %v2779 = vadd.f32 %v2747, 0.001
  %v2780 = vadd.f32 %v2748, 0.001
  %v2781 = vadd.f32 %v2749, 0.001
  %v2782 = vadd.f32 %v2750, 0.001
  %v2783 = vadd.f32 %v2751, 0.001
  %v2784 = vadd.f32 %v2752, 0.001
  %v2785 = vadd.f32 %v2753, 0.001
  %v2786 = vadd.f32 %v2754, 0.001
  %v2787 = vadd.f32 %v2755, 0.001
  %v2788 = vadd.f32 %v2756, 0.001
  %v2789 = vadd.f32 %v2757, 0.001
  %v2790 = vadd.f32 %v2758, 0.001
  %v2791 = vadd.f32 %v2759, 0.001
  %v2792 = vadd.f32 %v2760, 0.001
  %v2793 = vadd.f32 %v2761, 0.001
  %v2794 = vadd.f32 %v2762, 0.001
  %v2795 = vadd.f32 %v2763, 0.001
  %v2796 = vadd.f32 %v2764, 0.001
  %v2797 = vadd.f32 %v2765, 0.001
  %v2798 = vadd.f32 %v2766, 0.001
  %v2799 = vadd.f32 %v2767, 0.001
  %v2800 = vadd.f32 %v2768, 0.001
  %v2801 = vadd.f32 %v2769, 0.001
  %v2802 = vadd.f32 %v2770, 0.001
  %v2803 = vadd.f32 %v2771, 0.001
  %v2804 = vadd.f32 %v2772, 0.001
  %v2805 = vadd.f32 %v2773, 0.001
  %v2806 = vadd.f32 %v2774, 0.001
  %v2807 = vadd.f32 %v2775, 0.001
  %v2808 = vadd.f32 %v2776, 0.001
  %v2809 = vrsqrt.pop %v2777
  %v2810 = vrsqrt.pop %v2778
  %v2811 = vrsqrt.pop %v2779
  %v2812 = vrsqrt.pop %v2780
  %v2813 = vrsqrt.pop %v2781
  %v2814 = vrsqrt.pop %v2782
  %v2815 = vrsqrt.pop %v2783
  %v2816 = vrsqrt.pop %v2784
  %v2817 = vrsqrt.pop %v2785
  %v2818 = vrsqrt.pop %v2786
  %v2819 = vrsqrt.pop %v2787
  %v2820 = vrsqrt.pop %v2788
  %v2821 = vrsqrt.pop %v2789
  %v2822 = vrsqrt.pop %v2790
  %v2823 = vrsqrt.pop %v2791
  %v2824 = vrsqrt.pop %v2792
  %v2825 = vrsqrt.pop %v2793
  %v2826 = vrsqrt.pop %v2794
  %v2827 = vrsqrt.pop %v2795
  %v2828 = vrsqrt.pop %v2796
  %v2829 = vrsqrt.pop %v2797
  %v2830 = vrsqrt.pop %v2798
  %v2831 = vrsqrt.pop %v2799
  %v2832 = vrsqrt.pop %v2800
  %v2833 = vrsqrt.pop %v2801
  %v2834 = vrsqrt.pop %v2802
  %v2835 = vrsqrt.pop %v2803
  %v2836 = vrsqrt.pop %v2804
  %v2837 = vrsqrt.pop %v2805
  %v2838 = vrsqrt.pop %v2806
  %v2839 = vrsqrt.pop %v2807
  %v2840 = vrsqrt.pop %v2808
  %v2841 = vld [vmem:[%s2] sm:$0xff]
  %v2842 = vld [vmem:[%s2 + $0x8] sm:$0xff]
  %v2843 = vld [vmem:[%s2 + $0x10] sm:$0xff]
  %v2844 = vld [vmem:[%s2 + $0x18] sm:$0xff]
  %v2845 = vld [vmem:[%s2 + $0x20] sm:$0xff]
  %v2846 = vld [vmem:[%s2 + $0x28] sm:$0xff]
  %v2847 = vld [vmem:[%s2 + $0x30] sm:$0xff]
  %v2848 = vld [vmem:[%s2 + $0x38] sm:$0xff]
  %v2849 = vld [vmem:[%s2 + $0x40] sm:$0xff]
  %v2850 = vld [vmem:[%s2 + $0x48] sm:$0xff]
  %v2851 = vld [vmem:[%s2 + $0x50] sm:$0xff]
  %v2852 = vld [vmem:[%s2 + $0x58] sm:$0xff]
  %v2853 = vld [vmem:[%s2 + $0x60] sm:$0xff]
  %v2854 = vld [vmem:[%s2 + $0x68] sm:$0xff]
  %v2855 = vld [vmem:[%s2 + $0x70] sm:$0xff]
  %v2856 = vld [vmem:[%s2 + $0x78] sm:$0xff]
  %v2857 = vld [vmem:[%s2 + $0x80] sm:$0xff]
  %v2858 = vld [vmem:[%s2 + $0x88] sm:$0xff]
  %v2859 = vld [vmem:[%s2 + $0x90] sm:$0xff]
  %v2860 = vld [vmem:[%s2 + $0x98] sm:$0xff]
  %v2861 = vld [vmem:[%s2 + $0xa0] sm:$0xff]
  %v2862 = vld [vmem:[%s2 + $0xa8] sm:$0xff]
  %v2863 = vld [vmem:[%s2 + $0xb0] sm:$0xff]
  %v2864 = vld [vmem:[%s2 + $0xb8] sm:$0xff]
  %v2865 = vld [vmem:[%s2 + $0xc0] sm:$0xff]
  %v2866 = vld [vmem:[%s2 + $0xc8] sm:$0xff]
  %v2867 = vld [vmem:[%s2 + $0xd0] sm:$0xff]
  %v2868 = vld [vmem:[%s2 + $0xd8] sm:$0xff]
  %v2869 = vld [vmem:[%s2 + $0xe0] sm:$0xff]
  %v2870 = vld [vmem:[%s2 + $0xe8] sm:$0xff]
  %v2871 = vld [vmem:[%s2 + $0xf0] sm:$0xff]
  %v2872 = vld [vmem:[%s2 + $0xf8] sm:$0xff]
  %v2873 = vmul.f32 %v2809, %v2841
  %v2874 = vmul.f32 %v2810, %v2842
  %v2875 = vmul.f32 %v2811, %v2843
  %v2876 = vmul.f32 %v2812, %v2844
  %v2877 = vmul.f32 %v2813, %v2845
  %v2878 = vmul.f32 %v2814, %v2846
  %v2879 = vmul.f32 %v2815, %v2847
  %v2880 = vmul.f32 %v2816, %v2848
  %v2881 = vmul.f32 %v2817, %v2849
  %v2882 = vmul.f32 %v2818, %v2850
  %v2883 = vmul.f32 %v2819, %v2851
  %v2884 = vmul.f32 %v2820, %v2852
  %v2885 = vmul.f32 %v2821, %v2853
  %v2886 = vmul.f32 %v2822, %v2854
  %v2887 = vmul.f32 %v2823, %v2855
  %v2888 = vmul.f32 %v2824, %v2856
  %v2889 = vmul.f32 %v2825, %v2857
  %v2890 = vmul.f32 %v2826, %v2858
  %v2891 = vmul.f32 %v2827, %v2859
  %v2892 = vmul.f32 %v2828, %v2860
  %v2893 = vmul.f32 %v2829, %v2861
  %v2894 = vmul.f32 %v2830, %v2862
  %v2895 = vmul.f32 %v2831, %v2863
  %v2896 = vmul.f32 %v2832, %v2864
  %v2897 = vmul.f32 %v2833, %v2865
  %v2898 = vmul.f32 %v2834, %v2866
  %v2899 = vmul.f32 %v2835, %v2867
  %v2900 = vmul.f32 %v2836, %v2868
  %v2901 = vmul.f32 %v2837, %v2869
  %v2902 = vmul.f32 %v2838, %v2870
  %v2903 = vmul.f32 %v2839, %v2871
  %v2904 = vmul.f32 %v2840, %v2872
  %v2905 = vld [vmem:[%s3] sm:$0xff]
  %v2906 = vld [vmem:[%s3 + $0x8] sm:$0xff]
  %v2907 = vld [vmem:[%s3 + $0x10] sm:$0xff]
  %v2908 = vld [vmem:[%s3 + $0x18] sm:$0xff]
  %v2909 = vld [vmem:[%s3 + $0x20] sm:$0xff]
  %v2910 = vld [vmem:[%s3 + $0x28] sm:$0xff]
  %v2911 = vld [vmem:[%s3 + $0x30] sm:$0xff]
  %v2912 = vld [vmem:[%s3 + $0x38] sm:$0xff]
  %v2913 = vld [vmem:[%s3 + $0x40] sm:$0xff]
  %v2914 = vld [vmem:[%s3 + $0x48] sm:$0xff]
  %v2915 = vld [vmem:[%s3 + $0x50] sm:$0xff]
  %v2916 = vld [vmem:[%s3 + $0x58] sm:$0xff]
  %v2917 = vld [vmem:[%s3 + $0x60] sm:$0xff]
  %v2918 = vld [vmem:[%s3 + $0x68] sm:$0xff]
  %v2919 = vld [vmem:[%s3 + $0x70] sm:$0xff]
  %v2920 = vld [vmem:[%s3 + $0x78] sm:$0xff]
  %v2921 = vld [vmem:[%s3 + $0x80] sm:$0xff]
  %v2922 = vld [vmem:[%s3 + $0x88] sm:$0xff]
  %v2923 = vld [vmem:[%s3 + $0x90] sm:$0xff]
  %v2924 = vld [vmem:[%s3 + $0x98] sm:$0xff]
  %v2925 = vld [vmem:[%s3 + $0xa0] sm:$0xff]
  %v2926 = vld [vmem:[%s3 + $0xa8] sm:$0xff]
  %v2927 = vld [vmem:[%s3 + $0xb0] sm:$0xff]
  %v2928 = vld [vmem:[%s3 + $0xb8] sm:$0xff]
  %v2929 = vld [vmem:[%s3 + $0xc0] sm:$0xff]
  %v2930 = vld [vmem:[%s3 + $0xc8] sm:$0xff]
  %v2931 = vld [vmem:[%s3 + $0xd0] sm:$0xff]
  %v2932 = vld [vmem:[%s3 + $0xd8] sm:$0xff]
  %v2933 = vld [vmem:[%s3 + $0xe0] sm:$0xff]
  %v2934 = vld [vmem:[%s3 + $0xe8] sm:$0xff]
  %v2935 = vld [vmem:[%s3 + $0xf0] sm:$0xff]
  %v2936 = vld [vmem:[%s3 + $0xf8] sm:$0xff]
  %v2937 = vmul.f32 %v2521, %v2873
  %v2938 = vmul.f32 %v2522, %v2874
  %v2939 = vmul.f32 %v2523, %v2875
  %v2940 = vmul.f32 %v2524, %v2876
  %v2941 = vmul.f32 %v2525, %v2877
  %v2942 = vmul.f32 %v2526, %v2878
  %v2943 = vmul.f32 %v2527, %v2879
  %v2944 = vmul.f32 %v2528, %v2880
  %v2945 = vmul.f32 %v2529, %v2881
  %v2946 = vmul.f32 %v2530, %v2882
  %v2947 = vmul.f32 %v2531, %v2883
  %v2948 = vmul.f32 %v2532, %v2884
  %v2949 = vmul.f32 %v2533, %v2885
  %v2950 = vmul.f32 %v2534, %v2886
  %v2951 = vmul.f32 %v2535, %v2887
  %v2952 = vmul.f32 %v2536, %v2888
  %v2953 = vmul.f32 %v2537, %v2889
  %v2954 = vmul.f32 %v2538, %v2890
  %v2955 = vmul.f32 %v2539, %v2891
  %v2956 = vmul.f32 %v2540, %v2892
  %v2957 = vmul.f32 %v2541, %v2893
  %v2958 = vmul.f32 %v2542, %v2894
  %v2959 = vmul.f32 %v2543, %v2895
  %v2960 = vmul.f32 %v2544, %v2896
  %v2961 = vmul.f32 %v2545, %v2897
  %v2962 = vmul.f32 %v2546, %v2898
  %v2963 = vmul.f32 %v2547, %v2899
  %v2964 = vmul.f32 %v2548, %v2900
  %v2965 = vmul.f32 %v2549, %v2901
  %v2966 = vmul.f32 %v2550, %v2902
  %v2967 = vmul.f32 %v2551, %v2903
  %v2968 = vmul.f32 %v2552, %v2904
  %v2969 = vsub.f32 %v2905, %v2937
  %v2970 = vsub.f32 %v2906, %v2938
  %v2971 = vsub.f32 %v2907, %v2939
  %v2972 = vsub.f32 %v2908, %v2940
  %v2973 = vsub.f32 %v2909, %v2941
  %v2974 = vsub.f32 %v2910, %v2942
  %v2975 = vsub.f32 %v2911, %v2943
  %v2976 = vsub.f32 %v2912, %v2944
  %v2977 = vsub.f32 %v2913, %v2945
  %v2978 = vsub.f32 %v2914, %v2946
  %v2979 = vsub.f32 %v2915, %v2947
  %v2980 = vsub.f32 %v2916, %v2948
  %v2981 = vsub.f32 %v2917, %v2949
  %v2982 = vsub.f32 %v2918, %v2950
  %v2983 = vsub.f32 %v2919, %v2951
  %v2984 = vsub.f32 %v2920, %v2952
  %v2985 = vsub.f32 %v2921, %v2953
  %v2986 = vsub.f32 %v2922, %v2954
  %v2987 = vsub.f32 %v2923, %v2955
  %v2988 = vsub.f32 %v2924, %v2956
  %v2989 = vsub.f32 %v2925, %v2957
  %v2990 = vsub.f32 %v2926, %v2958
  %v2991 = vsub.f32 %v2927, %v2959
  %v2992 = vsub.f32 %v2928, %v2960
  %v2993 = vsub.f32 %v2929, %v2961
  %v2994 = vsub.f32 %v2930, %v2962
  %v2995 = vsub.f32 %v2931, %v2963
  %v2996 = vsub.f32 %v2932, %v2964
  %v2997 = vsub.f32 %v2933, %v2965
  %v2998 = vsub.f32 %v2934, %v2966
  %v2999 = vsub.f32 %v2935, %v2967
  %v3000 = vsub.f32 %v2936, %v2968
  %3002 = vset.pattern.permute.xlu0 0
  %3003 = vperm.xlu0 %3002, %v2873
  %v3004 = vpop.permute.xlu0 %3003
  %3007 = vset.pattern.permute.xlu0 0
  %3008 = vperm.xlu0 %3007, %v2874
  %v3009 = vpop.permute.xlu0 %3008
  %3012 = vset.pattern.permute.xlu0 0
  %3013 = vperm.xlu0 %3012, %v2875
  %v3014 = vpop.permute.xlu0 %3013
  %3017 = vset.pattern.permute.xlu0 0
  %3018 = vperm.xlu0 %3017, %v2876
  %v3019 = vpop.permute.xlu0 %3018
  %3022 = vset.pattern.permute.xlu0 0
  %3023 = vperm.xlu0 %3022, %v2877
  %v3024 = vpop.permute.xlu0 %3023
  %3027 = vset.pattern.permute.xlu0 0
  %3028 = vperm.xlu0 %3027, %v2878
  %v3029 = vpop.permute.xlu0 %3028
  %3032 = vset.pattern.permute.xlu0 0
  %3033 = vperm.xlu0 %3032, %v2879
  %v3034 = vpop.permute.xlu0 %3033
  %3037 = vset.pattern.permute.xlu0 0
  %3038 = vperm.xlu0 %3037, %v2880
  %v3039 = vpop.permute.xlu0 %3038
  %3042 = vset.pattern.permute.xlu0 0
  %3043 = vperm.xlu0 %3042, %v2881
  %v3044 = vpop.permute.xlu0 %3043
  %3047 = vset.pattern.permute.xlu0 0
  %3048 = vperm.xlu0 %3047, %v2882
  %v3049 = vpop.permute.xlu0 %3048
  %3052 = vset.pattern.permute.xlu0 0
  %3053 = vperm.xlu0 %3052, %v2883
  %v3054 = vpop.permute.xlu0 %3053
  %3057 = vset.pattern.permute.xlu0 0
  %3058 = vperm.xlu0 %3057, %v2884
  %v3059 = vpop.permute.xlu0 %3058
  %3062 = vset.pattern.permute.xlu0 0
  %3063 = vperm.xlu0 %3062, %v2885
  %v3064 = vpop.permute.xlu0 %3063
  %3067 = vset.pattern.permute.xlu0 0
  %3068 = vperm.xlu0 %3067, %v2886
  %v3069 = vpop.permute.xlu0 %3068
  %3072 = vset.pattern.permute.xlu0 0
  %3073 = vperm.xlu0 %3072, %v2887
  %v3074 = vpop.permute.xlu0 %3073
  %3077 = vset.pattern.permute.xlu0 0
  %3078 = vperm.xlu0 %3077, %v2888
  %v3079 = vpop.permute.xlu0 %3078
  %3082 = vset.pattern.permute.xlu0 0
  %3083 = vperm.xlu0 %3082, %v2889
  %v3084 = vpop.permute.xlu0 %3083
  %3087 = vset.pattern.permute.xlu0 0
  %3088 = vperm.xlu0 %3087, %v2890
  %v3089 = vpop.permute.xlu0 %3088
  %3092 = vset.pattern.permute.xlu0 0
  %3093 = vperm.xlu0 %3092, %v2891
  %v3094 = vpop.permute.xlu0 %3093
  %3097 = vset.pattern.permute.xlu0 0
  %3098 = vperm.xlu0 %3097, %v2892
  %v3099 = vpop.permute.xlu0 %3098
  %3102 = vset.pattern.permute.xlu0 0
  %3103 = vperm.xlu0 %3102, %v2893
  %v3104 = vpop.permute.xlu0 %3103
  %3107 = vset.pattern.permute.xlu0 0
  %3108 = vperm.xlu0 %3107, %v2894
  %v3109 = vpop.permute.xlu0 %3108
  %3112 = vset.pattern.permute.xlu0 0
  %3113 = vperm.xlu0 %3112, %v2895
  %v3114 = vpop.permute.xlu0 %3113
  %3117 = vset.pattern.permute.xlu0 0
  %3118 = vperm.xlu0 %3117, %v2896
  %v3119 = vpop.permute.xlu0 %3118
  %3122 = vset.pattern.permute.xlu0 0
  %3123 = vperm.xlu0 %3122, %v2897
  %v3124 = vpop.permute.xlu0 %3123
  %3127 = vset.pattern.permute.xlu0 0
  %3128 = vperm.xlu0 %3127, %v2898
  %v3129 = vpop.permute.xlu0 %3128
  %3132 = vset.pattern.permute.xlu0 0
  %3133 = vperm.xlu0 %3132, %v2899
  %v3134 = vpop.permute.xlu0 %3133
  %3137 = vset.pattern.permute.xlu0 0
  %3138 = vperm.xlu0 %3137, %v2900
  %v3139 = vpop.permute.xlu0 %3138
  %3142 = vset.pattern.permute.xlu0 0
  %3143 = vperm.xlu0 %3142, %v2901
  %v3144 = vpop.permute.xlu0 %3143
  %3147 = vset.pattern.permute.xlu0 0
  %3148 = vperm.xlu0 %3147, %v2902
  %v3149 = vpop.permute.xlu0 %3148
  %3152 = vset.pattern.permute.xlu0 0
  %3153 = vperm.xlu0 %3152, %v2903
  %v3154 = vpop.permute.xlu0 %3153
  %3157 = vset.pattern.permute.xlu0 0
  %3158 = vperm.xlu0 %3157, %v2904
  %v3159 = vpop.permute.xlu0 %3158
  %v3161 = vmul.f32 %v2298, %v3004
  %v3162 = vmul.f32 %v2301, %v3009
  %v3163 = vmul.f32 %v2306, %v3014
  %v3164 = vmul.f32 %v2309, %v3019
  %v3165 = vmul.f32 %v2314, %v3024
  %v3166 = vmul.f32 %v2317, %v3029
  %v3167 = vmul.f32 %v2322, %v3034
  %v3168 = vmul.f32 %v2325, %v3039
  %v3169 = vmul.f32 %v2330, %v3044
  %v3170 = vmul.f32 %v2333, %v3049
  %v3171 = vmul.f32 %v2338, %v3054
  %v3172 = vmul.f32 %v2341, %v3059
  %v3173 = vmul.f32 %v2346, %v3064
  %v3174 = vmul.f32 %v2349, %v3069
  %v3175 = vmul.f32 %v2354, %v3074
  %v3176 = vmul.f32 %v2357, %v3079
  %v3177 = vmul.f32 %v2362, %v3084
  %v3178 = vmul.f32 %v2365, %v3089
  %v3179 = vmul.f32 %v2370, %v3094
  %v3180 = vmul.f32 %v2373, %v3099
  %v3181 = vmul.f32 %v2378, %v3104
  %v3182 = vmul.f32 %v2381, %v3109
  %v3183 = vmul.f32 %v2386, %v3114
  %v3184 = vmul.f32 %v2389, %v3119
  %v3185 = vmul.f32 %v2394, %v3124
  %v3186 = vmul.f32 %v2397, %v3129
  %v3187 = vmul.f32 %v2402, %v3134
  %v3188 = vmul.f32 %v2405, %v3139
  %v3189 = vmul.f32 %v2410, %v3144
  %v3190 = vmul.f32 %v2413, %v3149
  %v3191 = vmul.f32 %v2418, %v3154
  %v3192 = vmul.f32 %v2421, %v3159
  %3194 = vset.pattern.permute.xlu0 0
  %3195 = vperm.xlu0 %3194, %v2969
  %v3196 = vpop.permute.xlu0 %3195
  %3199 = vset.pattern.permute.xlu0 0
  %3200 = vperm.xlu0 %3199, %v2970
  %v3201 = vpop.permute.xlu0 %3200
  %3204 = vset.pattern.permute.xlu0 0
  %3205 = vperm.xlu0 %3204, %v2971
  %v3206 = vpop.permute.xlu0 %3205
  %3209 = vset.pattern.permute.xlu0 0
  %3210 = vperm.xlu0 %3209, %v2972
  %v3211 = vpop.permute.xlu0 %3210
  %3214 = vset.pattern.permute.xlu0 0
  %3215 = vperm.xlu0 %3214, %v2973
  %v3216 = vpop.permute.xlu0 %3215
  %3219 = vset.pattern.permute.xlu0 0
  %3220 = vperm.xlu0 %3219, %v2974
  %v3221 = vpop.permute.xlu0 %3220
  %3224 = vset.pattern.permute.xlu0 0
  %3225 = vperm.xlu0 %3224, %v2975
  %v3226 = vpop.permute.xlu0 %3225
  %3229 = vset.pattern.permute.xlu0 0
  %3230 = vperm.xlu0 %3229, %v2976
  %v3231 = vpop.permute.xlu0 %3230
  %3234 = vset.pattern.permute.xlu0 0
  %3235 = vperm.xlu0 %3234, %v2977
  %v3236 = vpop.permute.xlu0 %3235
  %3239 = vset.pattern.permute.xlu0 0
  %3240 = vperm.xlu0 %3239, %v2978
  %v3241 = vpop.permute.xlu0 %3240
  %3244 = vset.pattern.permute.xlu0 0
  %3245 = vperm.xlu0 %3244, %v2979
  %v3246 = vpop.permute.xlu0 %3245
  %3249 = vset.pattern.permute.xlu0 0
  %3250 = vperm.xlu0 %3249, %v2980
  %v3251 = vpop.permute.xlu0 %3250
  %3254 = vset.pattern.permute.xlu0 0
  %3255 = vperm.xlu0 %3254, %v2981
  %v3256 = vpop.permute.xlu0 %3255
  %3259 = vset.pattern.permute.xlu0 0
  %3260 = vperm.xlu0 %3259, %v2982
  %v3261 = vpop.permute.xlu0 %3260
  %3264 = vset.pattern.permute.xlu0 0
  %3265 = vperm.xlu0 %3264, %v2983
  %v3266 = vpop.permute.xlu0 %3265
  %3269 = vset.pattern.permute.xlu0 0
  %3270 = vperm.xlu0 %3269, %v2984
  %v3271 = vpop.permute.xlu0 %3270
  %3274 = vset.pattern.permute.xlu0 0
  %3275 = vperm.xlu0 %3274, %v2985
  %v3276 = vpop.permute.xlu0 %3275
  %3279 = vset.pattern.permute.xlu0 0
  %3280 = vperm.xlu0 %3279, %v2986
  %v3281 = vpop.permute.xlu0 %3280
  %3284 = vset.pattern.permute.xlu0 0
  %3285 = vperm.xlu0 %3284, %v2987
  %v3286 = vpop.permute.xlu0 %3285
  %3289 = vset.pattern.permute.xlu0 0
  %3290 = vperm.xlu0 %3289, %v2988
  %v3291 = vpop.permute.xlu0 %3290
  %3294 = vset.pattern.permute.xlu0 0
  %3295 = vperm.xlu0 %3294, %v2989
  %v3296 = vpop.permute.xlu0 %3295
  %3299 = vset.pattern.permute.xlu0 0
  %3300 = vperm.xlu0 %3299, %v2990
  %v3301 = vpop.permute.xlu0 %3300
  %3304 = vset.pattern.permute.xlu0 0
  %3305 = vperm.xlu0 %3304, %v2991
  %v3306 = vpop.permute.xlu0 %3305
  %3309 = vset.pattern.permute.xlu0 0
  %3310 = vperm.xlu0 %3309, %v2992
  %v3311 = vpop.permute.xlu0 %3310
  %3314 = vset.pattern.permute.xlu0 0
  %3315 = vperm.xlu0 %3314, %v2993
  %v3316 = vpop.permute.xlu0 %3315
  %3319 = vset.pattern.permute.xlu0 0
  %3320 = vperm.xlu0 %3319, %v2994
  %v3321 = vpop.permute.xlu0 %3320
  %3324 = vset.pattern.permute.xlu0 0
  %3325 = vperm.xlu0 %3324, %v2995
  %v3326 = vpop.permute.xlu0 %3325
  %3329 = vset.pattern.permute.xlu0 0
  %3330 = vperm.xlu0 %3329, %v2996
  %v3331 = vpop.permute.xlu0 %3330
  %3334 = vset.pattern.permute.xlu0 0
  %3335 = vperm.xlu0 %3334, %v2997
  %v3336 = vpop.permute.xlu0 %3335
  %3339 = vset.pattern.permute.xlu0 0
  %3340 = vperm.xlu0 %3339, %v2998
  %v3341 = vpop.permute.xlu0 %3340
  %3344 = vset.pattern.permute.xlu0 0
  %3345 = vperm.xlu0 %3344, %v2999
  %v3346 = vpop.permute.xlu0 %3345
  %3349 = vset.pattern.permute.xlu0 0
  %3350 = vperm.xlu0 %3349, %v3000
  %v3351 = vpop.permute.xlu0 %3350
  %v3353 = vadd.f32 %v3161, %v3196
  %v3354 = vadd.f32 %v3162, %v3201
  %v3355 = vadd.f32 %v3163, %v3206
  %v3356 = vadd.f32 %v3164, %v3211
  %v3357 = vadd.f32 %v3165, %v3216
  %v3358 = vadd.f32 %v3166, %v3221
  %v3359 = vadd.f32 %v3167, %v3226
  %v3360 = vadd.f32 %v3168, %v3231
  %v3361 = vadd.f32 %v3169, %v3236
  %v3362 = vadd.f32 %v3170, %v3241
  %v3363 = vadd.f32 %v3171, %v3246
  %v3364 = vadd.f32 %v3172, %v3251
  %v3365 = vadd.f32 %v3173, %v3256
  %v3366 = vadd.f32 %v3174, %v3261
  %v3367 = vadd.f32 %v3175, %v3266
  %v3368 = vadd.f32 %v3176, %v3271
  %v3369 = vadd.f32 %v3177, %v3276
  %v3370 = vadd.f32 %v3178, %v3281
  %v3371 = vadd.f32 %v3179, %v3286
  %v3372 = vadd.f32 %v3180, %v3291
  %v3373 = vadd.f32 %v3181, %v3296
  %v3374 = vadd.f32 %v3182, %v3301
  %v3375 = vadd.f32 %v3183, %v3306
  %v3376 = vadd.f32 %v3184, %v3311
  %v3377 = vadd.f32 %v3185, %v3316
  %v3378 = vadd.f32 %v3186, %v3321
  %v3379 = vadd.f32 %v3187, %v3326
  %v3380 = vadd.f32 %v3188, %v3331
  %v3381 = vadd.f32 %v3189, %v3336
  %v3382 = vadd.f32 %v3190, %v3341
  %v3383 = vadd.f32 %v3191, %v3346
  %v3384 = vadd.f32 %v3192, %v3351
  %3385 = vst.msk [vmem:[%s4] sm:$0xff] %vm2424, %v3353
  %3386 = vst.msk [vmem:[%s4 + $0x8] sm:$0xff] %vm2424, %v3354
  %3387 = vst.msk [vmem:[%s4 + $0x10] sm:$0xff] %vm2424, %v3355
  %3388 = vst.msk [vmem:[%s4 + $0x18] sm:$0xff] %vm2424, %v3356
  %3389 = vst.msk [vmem:[%s4 + $0x20] sm:$0xff] %vm2424, %v3357
  %3390 = vst.msk [vmem:[%s4 + $0x28] sm:$0xff] %vm2424, %v3358
  %3391 = vst.msk [vmem:[%s4 + $0x30] sm:$0xff] %vm2424, %v3359
  %3392 = vst.msk [vmem:[%s4 + $0x38] sm:$0xff] %vm2424, %v3360
  %3393 = vst.msk [vmem:[%s4 + $0x40] sm:$0xff] %vm2424, %v3361
  %3394 = vst.msk [vmem:[%s4 + $0x48] sm:$0xff] %vm2424, %v3362
  %3395 = vst.msk [vmem:[%s4 + $0x50] sm:$0xff] %vm2424, %v3363
  %3396 = vst.msk [vmem:[%s4 + $0x58] sm:$0xff] %vm2424, %v3364
  %3397 = vst.msk [vmem:[%s4 + $0x60] sm:$0xff] %vm2424, %v3365
  %3398 = vst.msk [vmem:[%s4 + $0x68] sm:$0xff] %vm2424, %v3366
  %3399 = vst.msk [vmem:[%s4 + $0x70] sm:$0xff] %vm2424, %v3367
  %3400 = vst.msk [vmem:[%s4 + $0x78] sm:$0xff] %vm2424, %v3368
  %3401 = vst.msk [vmem:[%s4 + $0x80] sm:$0xff] %vm2424, %v3369
  %3402 = vst.msk [vmem:[%s4 + $0x88] sm:$0xff] %vm2424, %v3370
  %3403 = vst.msk [vmem:[%s4 + $0x90] sm:$0xff] %vm2424, %v3371
  %3404 = vst.msk [vmem:[%s4 + $0x98] sm:$0xff] %vm2424, %v3372
  %3405 = vst.msk [vmem:[%s4 + $0xa0] sm:$0xff] %vm2424, %v3373
  %3406 = vst.msk [vmem:[%s4 + $0xa8] sm:$0xff] %vm2424, %v3374
  %3407 = vst.msk [vmem:[%s4 + $0xb0] sm:$0xff] %vm2424, %v3375
  %3408 = vst.msk [vmem:[%s4 + $0xb8] sm:$0xff] %vm2424, %v3376
  %3409 = vst.msk [vmem:[%s4 + $0xc0] sm:$0xff] %vm2424, %v3377
  %3410 = vst.msk [vmem:[%s4 + $0xc8] sm:$0xff] %vm2424, %v3378
  %3411 = vst.msk [vmem:[%s4 + $0xd0] sm:$0xff] %vm2424, %v3379
  %3412 = vst.msk [vmem:[%s4 + $0xd8] sm:$0xff] %vm2424, %v3380
  %3413 = vst.msk [vmem:[%s4 + $0xe0] sm:$0xff] %vm2424, %v3381
  %3414 = vst.msk [vmem:[%s4 + $0xe8] sm:$0xff] %vm2424, %v3382
  %3415 = vst.msk [vmem:[%s4 + $0xf0] sm:$0xff] %vm2424, %v3383
  %3416 = vst.msk [vmem:[%s4 + $0xf8] sm:$0xff] %vm2424, %v3384
  // Predicated region
  $region18: #{tpu_custom_call.1} parent=0 // pred_check
    _
  $region19: #{tpu_custom_call.1} parent=0 // pred_check_branch
    %3418 = sbr.rel (0) target = $region21
  $region20: #{tpu_custom_call.1} parent=0 // pred_region
    _
  $region21: #{tpu_custom_call.1} parent=0 // pred_fallthru
    _
  // Predicated region
  $region22: #{tpu_custom_call.1} parent=0 // pred_check
    _
  $region23: #{tpu_custom_call.1} parent=0 // pred_check_branch
    %3420 = sbr.rel (0) target = $region25
  $region24: #{tpu_custom_call.1} parent=0 // pred_region
    _
  $region25: #{tpu_custom_call.1} parent=0 // pred_fallthru
    _

</llo_original>
